<compile_context>
chip_gen: v7x
topology: tpu7x:2x2x1
jax: 0.10.0
libtpu: 0.0.40
codegen_flags: <defaults>
</compile_context>

<pallas_src>
import jax
import jax.numpy as jnp
from jax.experimental import pallas as pl
from jax.experimental.pallas import tpu as pltpu

_LANE = 128


def _round_up(n, m):
    return ((n + m - 1) // m) * m


def _autoencoder_kernel(x_ref,
                        w1_ref, b1_ref,
                        w2_ref, b2_ref,
                        w3_ref, b3_ref,
                        w4_ref, b4_ref,
                        o_ref):
    """All four matmuls + activations fused; weights resident in VMEM,
    one batch tile per grid step."""
    wdtype = w1_ref.dtype
    x = x_ref[...]
    if x.dtype != wdtype:                      # cast only when weights are bf16
        x = x.astype(wdtype)

    # encoder
    h = jnp.dot(x, w1_ref[...], preferred_element_type=jnp.float32) + b1_ref[...]
    h = jnp.maximum(h, 0.0).astype(wdtype)                      # ReLU
    h = jnp.dot(h, w2_ref[...], preferred_element_type=jnp.float32) + b2_ref[...]
    h = jnp.maximum(h, 0.0).astype(wdtype)                      # ReLU

    # decoder
    h = jnp.dot(h, w3_ref[...], preferred_element_type=jnp.float32) + b3_ref[...]
    h = jnp.maximum(h, 0.0).astype(wdtype)                      # ReLU
    logits = jnp.dot(h, w4_ref[...], preferred_element_type=jnp.float32) + b4_ref[...]
    o_ref[...] = jax.nn.sigmoid(logits).astype(o_ref.dtype)     # Sigmoid


def prepare_params(raw, *, weights_dtype=jnp.float32):
    """Zero-pad the encoding dim up to a multiple of 128 lanes (results are
    bit-identical: padded w2 cols / b2 entries / w3 rows are exactly zero) and
    cast the weight matrices to `weights_dtype` (bf16 recommended on v6e/v7x).
    Biases stay f32 (added to the f32 MXU accumulator)."""
    w1, b1 = raw["w1"], raw["b1"]
    w2, b2 = raw["w2"], raw["b2"]
    w3, b3 = raw["w3"], raw["b3"]
    w4, b4 = raw["w4"], raw["b4"]

    enc = w2.shape[1]
    enc_pad = _round_up(enc, _LANE)
    if enc_pad != enc:
        pad = enc_pad - enc
        w2 = jnp.pad(w2, ((0, 0), (0, pad)))
        b2 = jnp.pad(b2, ((0, 0), (0, pad)))
        w3 = jnp.pad(w3, ((0, pad), (0, 0)))

    cast = lambda w: w.astype(weights_dtype)
    f32 = lambda b: b.astype(jnp.float32)
    return dict(w1=cast(w1), b1=f32(b1),
                w2=cast(w2), b2=f32(b2),
                w3=cast(w3), b3=f32(b3),
                w4=cast(w4), b4=f32(b4))


def autoencoder_forward(x, params, *, batch_tile=256, single_buffer_weights=True):
    """x: (B, input_size) float32. params: output of prepare_params()."""
    B, input_size = x.shape
    w1, b1 = params["w1"], params["b1"]
    w2, b2 = params["w2"], params["b2"]
    w3, b3 = params["w3"], params["b3"]
    w4, b4 = params["w4"], params["b4"]
    hidden = w1.shape[1]
    enc = w2.shape[1]
    assert w1.shape == (input_size, hidden)
    assert w4.shape == (hidden, input_size)

    # Batch tiling: large tiles keep the MXU busy; a small batch is processed in
    # a single grid step. Pad the batch (with zero rows) so it divides evenly.
    bt = min(_round_up(batch_tile, 8), _round_up(B, 8))
    B_pad = _round_up(B, bt)
    x_p = jnp.pad(x, ((0, B_pad - B), (0, 0))) if B_pad != B else x
    grid = (B_pad // bt,)

    def _weight_spec(shape, single_buffer):
        # Grid-invariant weight/bias blocks (same block every step). Single-
        # buffer them to save VMEM (v7x has only 64 MiB) when supported.
        index_map = lambda i, _n=len(shape): (0,) * _n
        if single_buffer:
            try:
                return pl.BlockSpec(shape, index_map, pipeline_mode=pl.Buffered(1))
            except TypeError:
                pass
        return pl.BlockSpec(shape, index_map)

    def _call(single_buffer):
        return pl.pallas_call(
            _autoencoder_kernel,
            out_shape=jax.ShapeDtypeStruct((B_pad, input_size), jnp.float32),
            grid_spec=pltpu.PrefetchScalarGridSpec(
                num_scalar_prefetch=0,
                grid=grid,
                in_specs=[
                    pl.BlockSpec((bt, input_size), lambda i: (i, 0)),      # x tile
                    _weight_spec((input_size, hidden), single_buffer),     # w1
                    _weight_spec((1, hidden), single_buffer),              # b1
                    _weight_spec((hidden, enc), single_buffer),            # w2
                    _weight_spec((1, enc), single_buffer),                 # b2
                    _weight_spec((enc, hidden), single_buffer),            # w3
                    _weight_spec((1, hidden), single_buffer),              # b3
                    _weight_spec((hidden, input_size), single_buffer),     # w4
                    _weight_spec((1, input_size), single_buffer),          # b4
                ],
                out_specs=pl.BlockSpec((bt, input_size), lambda i: (i, 0)),
            ),
            compiler_params=pltpu.CompilerParams(
                dimension_semantics=("parallel",)),
        )(x_p, w1, b1, w2, b2, w3, b3, w4, b4)

    # NOTE: weights (~1.5 MiB f32 at these sizes) easily fit VMEM. If hidden /
    # input_size ever grow past VMEM, switch to a K-tiled accumulator grid
    # instead of shrinking the batch tile.
    if single_buffer_weights:
        try:
            out = _call(True)
        except Exception:  # Pallas version without Buffered(1) support
            out = _call(False)
    else:
        out = _call(False)

    return out[:B] if B_pad != B else out


def init_params(key, input_size, encoding_dim, hidden=512):
    """PyTorch-style uniform init. Weights stored as (in, out)."""
    ks = jax.random.split(key, 8)

    def linear(kw, kb, fan_in, fan_out):
        bound = 1.0 / jnp.sqrt(fan_in)
        w = jax.random.uniform(kw, (fan_in, fan_out), jnp.float32, -bound, bound)
        b = jax.random.uniform(kb, (1, fan_out), jnp.float32, -bound, bound)
        return w, b

    w1, b1 = linear(ks[0], ks[1], input_size,   hidden)
    w2, b2 = linear(ks[2], ks[3], hidden,       encoding_dim)
    w3, b3 = linear(ks[4], ks[5], encoding_dim, hidden)
    w4, b4 = linear(ks[6], ks[7], hidden,       input_size)
    return dict(w1=w1, b1=b1, w2=w2, b2=b2, w3=w3, b3=b3, w4=w4, b4=b4)


def autoencoder_reference(x, p):
    h = jnp.maximum(x @ p["w1"] + p["b1"], 0.0)
    h = jnp.maximum(h @ p["w2"] + p["b2"], 0.0)
    h = jnp.maximum(h @ p["w3"] + p["b3"], 0.0)
    return jax.nn.sigmoid(h @ p["w4"] + p["b4"])


if __name__ == "__main__":
    key = jax.random.PRNGKey(0)
    k_x, k_p = jax.random.split(key)

    B, input_size, encoding_dim = 16, 256, 64
    x = jax.random.normal(k_x, (B, input_size), dtype=jnp.float32)
    raw = init_params(k_p, input_size, encoding_dim, hidden=512)
    ref = autoencoder_reference(x, raw)

    # f32 weights: bit-compatible with the reference (padding is exact zeros).
    p_f32 = prepare_params(raw, weights_dtype=jnp.float32)
    out = jax.block_until_ready(autoencoder_forward(x, p_f32))
    assert out.shape == (B, input_size)
    assert jnp.allclose(out, ref, atol=1e-5, rtol=1e-5)

    # bf16 weights (recommended on v6e/v7x): f32 accumulation, looser tolerance.
    p_bf16 = prepare_params(raw, weights_dtype=jnp.bfloat16)
    out_bf16 = jax.block_until_ready(autoencoder_forward(x, p_bf16))
    assert jnp.allclose(out_bf16, ref, atol=5e-2), float(jnp.max(jnp.abs(out_bf16 - ref)))

    print("KERNEL_OK")
</pallas_src>

<mosaic_0001>
module attributes {stable_mosaic.version = 11 : i64} {
  func.func @_autoencoder_kernel(%arg0: i32, %arg1: memref<16x256xf32, #tpu.memory_space<vmem>>, %arg2: memref<256x512xf32, #tpu.memory_space<vmem>>, %arg3: memref<1x512xf32, #tpu.memory_space<vmem>>, %arg4: memref<512x128xf32, #tpu.memory_space<vmem>>, %arg5: memref<1x128xf32, #tpu.memory_space<vmem>>, %arg6: memref<128x512xf32, #tpu.memory_space<vmem>>, %arg7: memref<1x512xf32, #tpu.memory_space<vmem>>, %arg8: memref<512x256xf32, #tpu.memory_space<vmem>>, %arg9: memref<1x256xf32, #tpu.memory_space<vmem>>, %arg10: memref<16x256xf32, #tpu.memory_space<vmem>>) attributes {dimension_semantics = [#tpu.dimension_semantics<parallel>], iteration_bounds = array<i64: 1>, scalar_prefetch = 0 : i64, scratch_operands = 0 : i64, tpu.core_type = #tpu.core_type<tc>, window_params = [{transform_indices = @transform_0, window_bounds = array<i64: 16, 256>}, {pipeline_mode = #tpu.pipeline_mode<synchronous>, transform_indices = @transform_1, window_bounds = array<i64: 256, 512>}, {pipeline_mode = #tpu.pipeline_mode<synchronous>, transform_indices = @transform_2, window_bounds = array<i64: 1, 512>}, {pipeline_mode = #tpu.pipeline_mode<synchronous>, transform_indices = @transform_3, window_bounds = array<i64: 512, 128>}, {pipeline_mode = #tpu.pipeline_mode<synchronous>, transform_indices = @transform_4, window_bounds = array<i64: 1, 128>}, {pipeline_mode = #tpu.pipeline_mode<synchronous>, transform_indices = @transform_5, window_bounds = array<i64: 128, 512>}, {pipeline_mode = #tpu.pipeline_mode<synchronous>, transform_indices = @transform_6, window_bounds = array<i64: 1, 512>}, {pipeline_mode = #tpu.pipeline_mode<synchronous>, transform_indices = @transform_7, window_bounds = array<i64: 512, 256>}, {pipeline_mode = #tpu.pipeline_mode<synchronous>, transform_indices = @transform_8, window_bounds = array<i64: 1, 256>}, {transform_indices = @transform_9, window_bounds = array<i64: 16, 256>}]} {
    %c0 = arith.constant 0 : index
    %c0_0 = arith.constant 0 : index
    %0 = vector.load %arg1[%c0, %c0_0] : memref<16x256xf32, #tpu.memory_space<vmem>>, vector<16x256xf32>
    %c0_1 = arith.constant 0 : index
    %c0_2 = arith.constant 0 : index
    %1 = vector.load %arg2[%c0_1, %c0_2] : memref<256x512xf32, #tpu.memory_space<vmem>>, vector<256x512xf32>
    %cst = arith.constant dense<0.000000e+00> : vector<16x512xf32>
    %2 = tpu.matmul %0, %1, %cst {dimension_numbers = #tpu.dot_dimension_numbers<[1], [0], [0], [1], [0, 0, 1, 1], [], []>} : vector<16x256xf32>, vector<256x512xf32>, vector<16x512xf32> -> vector<16x512xf32>
    %c0_3 = arith.constant 0 : index
    %c0_4 = arith.constant 0 : index
    %3 = vector.load %arg3[%c0_3, %c0_4] : memref<1x512xf32, #tpu.memory_space<vmem>>, vector<1x512xf32>
    %4 = vector.broadcast %3 : vector<1x512xf32> to vector<16x512xf32>
    %5 = arith.addf %2, %4 : vector<16x512xf32>
    %cst_5 = arith.constant 0.000000e+00 : f32
    %6 = vector.broadcast %cst_5 : f32 to vector<16x512xf32>
    %7 = arith.maximumf %5, %6 : vector<16x512xf32>
    %c0_6 = arith.constant 0 : index
    %c0_7 = arith.constant 0 : index
    %8 = vector.load %arg4[%c0_6, %c0_7] : memref<512x128xf32, #tpu.memory_space<vmem>>, vector<512x128xf32>
    %cst_8 = arith.constant dense<0.000000e+00> : vector<16x128xf32>
    %9 = tpu.matmul %7, %8, %cst_8 {dimension_numbers = #tpu.dot_dimension_numbers<[1], [0], [0], [1], [0, 0, 1, 1], [], []>} : vector<16x512xf32>, vector<512x128xf32>, vector<16x128xf32> -> vector<16x128xf32>
    %c0_9 = arith.constant 0 : index
    %c0_10 = arith.constant 0 : index
    %10 = vector.load %arg5[%c0_9, %c0_10] : memref<1x128xf32, #tpu.memory_space<vmem>>, vector<1x128xf32>
    %11 = vector.broadcast %10 : vector<1x128xf32> to vector<16x128xf32>
    %12 = arith.addf %9, %11 : vector<16x128xf32>
    %cst_11 = arith.constant 0.000000e+00 : f32
    %13 = vector.broadcast %cst_11 : f32 to vector<16x128xf32>
    %14 = arith.maximumf %12, %13 : vector<16x128xf32>
    %c0_12 = arith.constant 0 : index
    %c0_13 = arith.constant 0 : index
    %15 = vector.load %arg6[%c0_12, %c0_13] : memref<128x512xf32, #tpu.memory_space<vmem>>, vector<128x512xf32>
    %cst_14 = arith.constant dense<0.000000e+00> : vector<16x512xf32>
    %16 = tpu.matmul %14, %15, %cst_14 {dimension_numbers = #tpu.dot_dimension_numbers<[1], [0], [0], [1], [0, 0, 1, 1], [], []>} : vector<16x128xf32>, vector<128x512xf32>, vector<16x512xf32> -> vector<16x512xf32>
    %c0_15 = arith.constant 0 : index
    %c0_16 = arith.constant 0 : index
    %17 = vector.load %arg7[%c0_15, %c0_16] : memref<1x512xf32, #tpu.memory_space<vmem>>, vector<1x512xf32>
    %18 = vector.broadcast %17 : vector<1x512xf32> to vector<16x512xf32>
    %19 = arith.addf %16, %18 : vector<16x512xf32>
    %cst_17 = arith.constant 0.000000e+00 : f32
    %20 = vector.broadcast %cst_17 : f32 to vector<16x512xf32>
    %21 = arith.maximumf %19, %20 : vector<16x512xf32>
    %c0_18 = arith.constant 0 : index
    %c0_19 = arith.constant 0 : index
    %22 = vector.load %arg8[%c0_18, %c0_19] : memref<512x256xf32, #tpu.memory_space<vmem>>, vector<512x256xf32>
    %cst_20 = arith.constant dense<0.000000e+00> : vector<16x256xf32>
    %23 = tpu.matmul %21, %22, %cst_20 {dimension_numbers = #tpu.dot_dimension_numbers<[1], [0], [0], [1], [0, 0, 1, 1], [], []>} : vector<16x512xf32>, vector<512x256xf32>, vector<16x256xf32> -> vector<16x256xf32>
    %c0_21 = arith.constant 0 : index
    %c0_22 = arith.constant 0 : index
    %24 = vector.load %arg9[%c0_21, %c0_22] : memref<1x256xf32, #tpu.memory_space<vmem>>, vector<1x256xf32>
    %25 = vector.broadcast %24 : vector<1x256xf32> to vector<16x256xf32>
    %26 = arith.addf %23, %25 : vector<16x256xf32>
    %27 = arith.negf %26 : vector<16x256xf32>
    %28 = math.exp %27 : vector<16x256xf32>
    %cst_23 = arith.constant 1.000000e+00 : f32
    %29 = vector.broadcast %cst_23 : f32 to vector<16x256xf32>
    %30 = arith.addf %29, %28 : vector<16x256xf32>
    %31 = arith.divf %29, %30 : vector<16x256xf32>
    %c0_24 = arith.constant 0 : index
    %c0_25 = arith.constant 0 : index
    %32 = vector.load %arg10[%c0_24, %c0_25] : memref<16x256xf32, #tpu.memory_space<vmem>>, vector<16x256xf32>
    tpu.vector_store %arg10[%c0_24, %c0_25], %31 {strides = array<i32>} : memref<16x256xf32, #tpu.memory_space<vmem>>, vector<16x256xf32>,
    return
  }
  func.func @transform_0(%arg0: i32) -> (i32, i32) {
    %c0_i32 = arith.constant 0 : i32
    %c0_i32_0 = arith.constant 0 : i32
    return %arg0, %c0_i32 : i32, i32
  }
  func.func @transform_1(%arg0: i32) -> (i32, i32) {
    %c0_i32 = arith.constant 0 : i32
    %c0_i32_0 = arith.constant 0 : i32
    %c0_i32_1 = arith.constant 0 : i32
    return %c0_i32, %c0_i32_0 : i32, i32
  }
  func.func @transform_2(%arg0: i32) -> (i32, i32) {
    %c0_i32 = arith.constant 0 : i32
    %c0_i32_0 = arith.constant 0 : i32
    %c0_i32_1 = arith.constant 0 : i32
    return %c0_i32, %c0_i32_0 : i32, i32
  }
  func.func @transform_3(%arg0: i32) -> (i32, i32) {
    %c0_i32 = arith.constant 0 : i32
    %c0_i32_0 = arith.constant 0 : i32
    %c0_i32_1 = arith.constant 0 : i32
    return %c0_i32, %c0_i32_0 : i32, i32
  }
  func.func @transform_4(%arg0: i32) -> (i32, i32) {
    %c0_i32 = arith.constant 0 : i32
    %c0_i32_0 = arith.constant 0 : i32
    %c0_i32_1 = arith.constant 0 : i32
    return %c0_i32, %c0_i32_0 : i32, i32
  }
  func.func @transform_5(%arg0: i32) -> (i32, i32) {
    %c0_i32 = arith.constant 0 : i32
    %c0_i32_0 = arith.constant 0 : i32
    %c0_i32_1 = arith.constant 0 : i32
    return %c0_i32, %c0_i32_0 : i32, i32
  }
  func.func @transform_6(%arg0: i32) -> (i32, i32) {
    %c0_i32 = arith.constant 0 : i32
    %c0_i32_0 = arith.constant 0 : i32
    %c0_i32_1 = arith.constant 0 : i32
    return %c0_i32, %c0_i32_0 : i32, i32
  }
  func.func @transform_7(%arg0: i32) -> (i32, i32) {
    %c0_i32 = arith.constant 0 : i32
    %c0_i32_0 = arith.constant 0 : i32
    %c0_i32_1 = arith.constant 0 : i32
    return %c0_i32, %c0_i32_0 : i32, i32
  }
  func.func @transform_8(%arg0: i32) -> (i32, i32) {
    %c0_i32 = arith.constant 0 : i32
    %c0_i32_0 = arith.constant 0 : i32
    %c0_i32_1 = arith.constant 0 : i32
    return %c0_i32, %c0_i32_0 : i32, i32
  }
  func.func @transform_9(%arg0: i32) -> (i32, i32) {
    %c0_i32 = arith.constant 0 : i32
    %c0_i32_0 = arith.constant 0 : i32
    return %arg0, %c0_i32 : i32, i32
  }
}

module attributes {stable_mosaic.version = 11 : i64} {
  func.func @_autoencoder_kernel(%arg0: i32, %arg1: memref<16x256xf32, #tpu.memory_space<vmem>>, %arg2: memref<256x512xf32, #tpu.memory_space<vmem>>, %arg3: memref<1x512xf32, #tpu.memory_space<vmem>>, %arg4: memref<512x128xf32, #tpu.memory_space<vmem>>, %arg5: memref<1x128xf32, #tpu.memory_space<vmem>>, %arg6: memref<128x512xf32, #tpu.memory_space<vmem>>, %arg7: memref<1x512xf32, #tpu.memory_space<vmem>>, %arg8: memref<512x256xf32, #tpu.memory_space<vmem>>, %arg9: memref<1x256xf32, #tpu.memory_space<vmem>>, %arg10: memref<16x256xf32, #tpu.memory_space<vmem>>) attributes {dimension_semantics = [#tpu.dimension_semantics<parallel>], iteration_bounds = array<i64: 1>, scalar_prefetch = 0 : i64, scratch_operands = 0 : i64, tpu.core_type = #tpu.core_type<tc>, window_params = [{transform_indices = @transform_0, window_bounds = array<i64: 16, 256>}, {pipeline_mode = #tpu.pipeline_mode<synchronous>, transform_indices = @transform_1, window_bounds = array<i64: 256, 512>}, {pipeline_mode = #tpu.pipeline_mode<synchronous>, transform_indices = @transform_2, window_bounds = array<i64: 1, 512>}, {pipeline_mode = #tpu.pipeline_mode<synchronous>, transform_indices = @transform_3, window_bounds = array<i64: 512, 128>}, {pipeline_mode = #tpu.pipeline_mode<synchronous>, transform_indices = @transform_4, window_bounds = array<i64: 1, 128>}, {pipeline_mode = #tpu.pipeline_mode<synchronous>, transform_indices = @transform_5, window_bounds = array<i64: 128, 512>}, {pipeline_mode = #tpu.pipeline_mode<synchronous>, transform_indices = @transform_6, window_bounds = array<i64: 1, 512>}, {pipeline_mode = #tpu.pipeline_mode<synchronous>, transform_indices = @transform_7, window_bounds = array<i64: 512, 256>}, {pipeline_mode = #tpu.pipeline_mode<synchronous>, transform_indices = @transform_8, window_bounds = array<i64: 1, 256>}, {transform_indices = @transform_9, window_bounds = array<i64: 16, 256>}]} {
    %c0 = arith.constant 0 : index
    %c0_0 = arith.constant 0 : index
    %0 = vector.load %arg1[%c0, %c0_0] : memref<16x256xf32, #tpu.memory_space<vmem>>, vector<16x256xf32>
    %c0_1 = arith.constant 0 : index
    %c0_2 = arith.constant 0 : index
    %1 = vector.load %arg2[%c0_1, %c0_2] : memref<256x512xf32, #tpu.memory_space<vmem>>, vector<256x512xf32>
    %cst = arith.constant dense<0.000000e+00> : vector<16x512xf32>
    %2 = tpu.matmul %0, %1, %cst {dimension_numbers = #tpu.dot_dimension_numbers<[1], [0], [0], [1], [0, 0, 1, 1], [], []>} : vector<16x256xf32>, vector<256x512xf32>, vector<16x512xf32> -> vector<16x512xf32>
    %c0_3 = arith.constant 0 : index
    %c0_4 = arith.constant 0 : index
    %3 = vector.load %arg3[%c0_3, %c0_4] : memref<1x512xf32, #tpu.memory_space<vmem>>, vector<1x512xf32>
    %4 = vector.broadcast %3 : vector<1x512xf32> to vector<16x512xf32>
    %5 = arith.addf %2, %4 : vector<16x512xf32>
    %cst_5 = arith.constant 0.000000e+00 : f32
    %6 = vector.broadcast %cst_5 : f32 to vector<16x512xf32>
    %7 = arith.maximumf %5, %6 : vector<16x512xf32>
    %c0_6 = arith.constant 0 : index
    %c0_7 = arith.constant 0 : index
    %8 = vector.load %arg4[%c0_6, %c0_7] : memref<512x128xf32, #tpu.memory_space<vmem>>, vector<512x128xf32>
    %cst_8 = arith.constant dense<0.000000e+00> : vector<16x128xf32>
    %9 = tpu.matmul %7, %8, %cst_8 {dimension_numbers = #tpu.dot_dimension_numbers<[1], [0], [0], [1], [0, 0, 1, 1], [], []>} : vector<16x512xf32>, vector<512x128xf32>, vector<16x128xf32> -> vector<16x128xf32>
    %c0_9 = arith.constant 0 : index
    %c0_10 = arith.constant 0 : index
    %10 = vector.load %arg5[%c0_9, %c0_10] : memref<1x128xf32, #tpu.memory_space<vmem>>, vector<1x128xf32>
    %11 = vector.broadcast %10 : vector<1x128xf32> to vector<16x128xf32>
    %12 = arith.addf %9, %11 : vector<16x128xf32>
    %cst_11 = arith.constant 0.000000e+00 : f32
    %13 = vector.broadcast %cst_11 : f32 to vector<16x128xf32>
    %14 = arith.maximumf %12, %13 : vector<16x128xf32>
    %c0_12 = arith.constant 0 : index
    %c0_13 = arith.constant 0 : index
    %15 = vector.load %arg6[%c0_12, %c0_13] : memref<128x512xf32, #tpu.memory_space<vmem>>, vector<128x512xf32>
    %cst_14 = arith.constant dense<0.000000e+00> : vector<16x512xf32>
    %16 = tpu.matmul %14, %15, %cst_14 {dimension_numbers = #tpu.dot_dimension_numbers<[1], [0], [0], [1], [0, 0, 1, 1], [], []>} : vector<16x128xf32>, vector<128x512xf32>, vector<16x512xf32> -> vector<16x512xf32>
    %c0_15 = arith.constant 0 : index
    %c0_16 = arith.constant 0 : index
    %17 = vector.load %arg7[%c0_15, %c0_16] : memref<1x512xf32, #tpu.memory_space<vmem>>, vector<1x512xf32>
    %18 = vector.broadcast %17 : vector<1x512xf32> to vector<16x512xf32>
    %19 = arith.addf %16, %18 : vector<16x512xf32>
    %cst_17 = arith.constant 0.000000e+00 : f32
    %20 = vector.broadcast %cst_17 : f32 to vector<16x512xf32>
    %21 = arith.maximumf %19, %20 : vector<16x512xf32>
    %c0_18 = arith.constant 0 : index
    %c0_19 = arith.constant 0 : index
    %22 = vector.load %arg8[%c0_18, %c0_19] : memref<512x256xf32, #tpu.memory_space<vmem>>, vector<512x256xf32>
    %cst_20 = arith.constant dense<0.000000e+00> : vector<16x256xf32>
    %23 = tpu.matmul %21, %22, %cst_20 {dimension_numbers = #tpu.dot_dimension_numbers<[1], [0], [0], [1], [0, 0, 1, 1], [], []>} : vector<16x512xf32>, vector<512x256xf32>, vector<16x256xf32> -> vector<16x256xf32>
    %c0_21 = arith.constant 0 : index
    %c0_22 = arith.constant 0 : index
    %24 = vector.load %arg9[%c0_21, %c0_22] : memref<1x256xf32, #tpu.memory_space<vmem>>, vector<1x256xf32>
    %25 = vector.broadcast %24 : vector<1x256xf32> to vector<16x256xf32>
    %26 = arith.addf %23, %25 : vector<16x256xf32>
    %27 = arith.negf %26 : vector<16x256xf32>
    %28 = math.exp %27 : vector<16x256xf32>
    %cst_23 = arith.constant 1.000000e+00 : f32
    %29 = vector.broadcast %cst_23 : f32 to vector<16x256xf32>
    %30 = arith.addf %29, %28 : vector<16x256xf32>
    %31 = arith.divf %29, %30 : vector<16x256xf32>
    %c0_24 = arith.constant 0 : index
    %c0_25 = arith.constant 0 : index
    %32 = vector.load %arg10[%c0_24, %c0_25] : memref<16x256xf32, #tpu.memory_space<vmem>>, vector<16x256xf32>
    tpu.vector_store %arg10[%c0_24, %c0_25], %31 {strides = array<i32>} : memref<16x256xf32, #tpu.memory_space<vmem>>, vector<16x256xf32>,
    return
  }
  func.func @transform_0(%arg0: i32) -> (i32, i32) {
    %c0_i32 = arith.constant 0 : i32
    %c0_i32_0 = arith.constant 0 : i32
    return %arg0, %c0_i32 : i32, i32
  }
  func.func @transform_1(%arg0: i32) -> (i32, i32) {
    %c0_i32 = arith.constant 0 : i32
    %c0_i32_0 = arith.constant 0 : i32
    %c0_i32_1 = arith.constant 0 : i32
    return %c0_i32, %c0_i32_0 : i32, i32
  }
  func.func @transform_2(%arg0: i32) -> (i32, i32) {
    %c0_i32 = arith.constant 0 : i32
    %c0_i32_0 = arith.constant 0 : i32
    %c0_i32_1 = arith.constant 0 : i32
    return %c0_i32, %c0_i32_0 : i32, i32
  }
  func.func @transform_3(%arg0: i32) -> (i32, i32) {
    %c0_i32 = arith.constant 0 : i32
    %c0_i32_0 = arith.constant 0 : i32
    %c0_i32_1 = arith.constant 0 : i32
    return %c0_i32, %c0_i32_0 : i32, i32
  }
  func.func @transform_4(%arg0: i32) -> (i32, i32) {
    %c0_i32 = arith.constant 0 : i32
    %c0_i32_0 = arith.constant 0 : i32
    %c0_i32_1 = arith.constant 0 : i32
    return %c0_i32, %c0_i32_0 : i32, i32
  }
  func.func @transform_5(%arg0: i32) -> (i32, i32) {
    %c0_i32 = arith.constant 0 : i32
    %c0_i32_0 = arith.constant 0 : i32
    %c0_i32_1 = arith.constant 0 : i32
    return %c0_i32, %c0_i32_0 : i32, i32
  }
  func.func @transform_6(%arg0: i32) -> (i32, i32) {
    %c0_i32 = arith.constant 0 : i32
    %c0_i32_0 = arith.constant 0 : i32
    %c0_i32_1 = arith.constant 0 : i32
    return %c0_i32, %c0_i32_0 : i32, i32
  }
  func.func @transform_7(%arg0: i32) -> (i32, i32) {
    %c0_i32 = arith.constant 0 : i32
    %c0_i32_0 = arith.constant 0 : i32
    %c0_i32_1 = arith.constant 0 : i32
    return %c0_i32, %c0_i32_0 : i32, i32
  }
  func.func @transform_8(%arg0: i32) -> (i32, i32) {
    %c0_i32 = arith.constant 0 : i32
    %c0_i32_0 = arith.constant 0 : i32
    %c0_i32_1 = arith.constant 0 : i32
    return %c0_i32, %c0_i32_0 : i32, i32
  }
  func.func @transform_9(%arg0: i32) -> (i32, i32) {
    %c0_i32 = arith.constant 0 : i32
    %c0_i32_0 = arith.constant 0 : i32
    return %arg0, %c0_i32 : i32, i32
  }
}

</mosaic_0001>

<llo_original>
// kernel: tpu_custom_call.1
$region0: #{tpu_custom_call.1}
  #allocation0 [shape = 'u32[]', space=smem, size = 0x4, offset = 0x4, fixed_abs, tag = 'smem constant byte address 0x4 - core index']
  #allocation1 [shape = 'u32[144,128]{1,0:T(1,128)}', space=vmem, size = 0x12000, scoped, tag = 'internal scratch']
  %s0 = inlined_call_operand.hbm [shape: f32[16,256], index: 0, kind: input, shape index: {}]
  %s1 = inlined_call_operand.hbm [shape: f32[256,512], index: 1, kind: input, shape index: {}]
  %s2 = inlined_call_operand.vmem [shape: f32[1,512], index: 2, kind: input, shape index: {}]
  %s3 = inlined_call_operand.hbm [shape: f32[512,128], index: 3, kind: input, shape index: {}]
  %s4 = inlined_call_operand.vmem [shape: f32[1,128], index: 4, kind: input, shape index: {}]
  %s5 = inlined_call_operand.hbm [shape: f32[128,512], index: 5, kind: input, shape index: {}]
  %s6 = inlined_call_operand.vmem [shape: f32[1,512], index: 6, kind: input, shape index: {}]
  %s7 = inlined_call_operand.hbm [shape: f32[512,256], index: 7, kind: input, shape index: {}]
  %s8 = inlined_call_operand.vmem [shape: f32[1,256], index: 8, kind: input, shape index: {}]
  %s9 = inlined_call_operand.hbm [shape: f32[16,256], index: 9, kind: output, shape index: {}]
  %s10 = sld [smem:[#allocation0]]
  $region66: #{tpu_custom_call.1} parent=0
    _
  %s12 = ssub.s32 1, %s10
  %s13 = scalar_select 0, %s12, %s10
  $region1: #{tpu_custom_call.1} parent=0
    #allocation2 [shape = 'u8[16384]{0}', space=vmem, size = 0x4000, scoped, tag = 'input window, operand 0, single buffered']
    #allocation3 [shape = 's32[1]{0}', space=sflag, size = 0x4, scoped, tag = 'scoped memory for tpu_custom_call.1']
    #allocation4 [shape = 's32[1]{0}', space=sflag, size = 0x4, scoped, tag = 'scoped memory for tpu_custom_call.1']
    #allocation5 [shape = 'u8[524288]{0}', space=vmem, size = 0x80000, scoped, tag = 'input window, operand 1, single buffered']
    #allocation6 [shape = 's32[1]{0}', space=sflag, size = 0x4, scoped, tag = 'scoped memory for tpu_custom_call.1']
    #allocation7 [shape = 'u8[262144]{0}', space=vmem, size = 0x40000, scoped, tag = 'input window, operand 3, single buffered']
    #allocation8 [shape = 'u8[262144]{0}', space=vmem, size = 0x40000, scoped, tag = 'input window, operand 5, single buffered']
    #allocation9 [shape = 's32[1]{0}', space=sflag, size = 0x4, scoped, tag = 'scoped memory for tpu_custom_call.1']
    #allocation10 [shape = 'u8[524288]{0}', space=vmem, size = 0x80000, scoped, tag = 'input window, operand 7, single buffered']
    #allocation11 [shape = 'u8[16384]{0}', space=vmem, size = 0x4000, scoped, tag = 'output window, operand 0, single buffered']
    %14 = vsyncpa [#allocation3], 0
    %15 = vsyncpa [#allocation6], 0
    %16 = vsyncpa [#allocation9], 0
    %17 = vsyncpa [#allocation4], 0
    // Predicated region
    $region2: #{tpu_custom_call.1} parent=1 // pred_check
      _
    $region3: #{tpu_custom_call.1} parent=1 // pred_check_branch
      %19 = sbr.rel (0) target = $region5
    $region4: #{tpu_custom_call.1} parent=1 // pred_region
      %s21 = ssub.s32 512, 512
      %22 = vsyncadd [#allocation3], %s21
      %s23 = sshll.u32 [#allocation2], 4
      %s24 = int_to_ptr.vmem [resolvable:$true] %s23
      %29 = dma.hbm_to_vmem [thread:$0]  %s0, 512, %s24, [#allocation3], 256, 256, 16
    $region5: #{tpu_custom_call.1} parent=1 // pred_fallthru
      _
    // Predicated region
    $region6: #{tpu_custom_call.1} parent=1 // pred_check
      _
    $region7: #{tpu_custom_call.1} parent=1 // pred_check_branch
      %31 = sbr.rel (0) target = $region9
    $region8: #{tpu_custom_call.1} parent=1 // pred_region
      %s33 = ssub.s32 16384, 16384
      %34 = vsyncadd [#allocation6], %s33
      %s35 = sshll.u32 [#allocation5], 4
      %s36 = int_to_ptr.vmem [resolvable:$true] %s35
      %41 = dma.hbm_to_vmem [thread:$0]  %s1, 16384, %s36, [#allocation6], 512, 512, 32
    $region9: #{tpu_custom_call.1} parent=1 // pred_fallthru
      _
    // Predicated region
    $region10: #{tpu_custom_call.1} parent=1 // pred_check
      _
    $region11: #{tpu_custom_call.1} parent=1 // pred_check_branch
      %43 = sbr.rel (0) target = $region13
    $region12: #{tpu_custom_call.1} parent=1 // pred_region
      _
    $region13: #{tpu_custom_call.1} parent=1 // pred_fallthru
      _
    // Predicated region
    $region14: #{tpu_custom_call.1} parent=1 // pred_check
      _
    $region15: #{tpu_custom_call.1} parent=1 // pred_check_branch
      %45 = sbr.rel (0) target = $region17
    $region16: #{tpu_custom_call.1} parent=1 // pred_region
      %s47 = ssub.s32 8192, 8192
      %48 = vsyncadd [#allocation6], %s47
      %s49 = sshll.u32 [#allocation7], 4
      %s50 = int_to_ptr.vmem [resolvable:$true] %s49
      %55 = dma.hbm_to_vmem [thread:$0]  %s3, 8192, %s50, [#allocation6], 128, 128, 8
    $region17: #{tpu_custom_call.1} parent=1 // pred_fallthru
      _
    // Predicated region
    $region18: #{tpu_custom_call.1} parent=1 // pred_check
      _
    $region19: #{tpu_custom_call.1} parent=1 // pred_check_branch
      %57 = sbr.rel (0) target = $region21
    $region20: #{tpu_custom_call.1} parent=1 // pred_region
      _
    $region21: #{tpu_custom_call.1} parent=1 // pred_fallthru
      _
    // Predicated region
    $region22: #{tpu_custom_call.1} parent=1 // pred_check
      _
    $region23: #{tpu_custom_call.1} parent=1 // pred_check_branch
      %59 = sbr.rel (0) target = $region25
    $region24: #{tpu_custom_call.1} parent=1 // pred_region
      %s61 = ssub.s32 8192, 8192
      %62 = vsyncadd [#allocation9], %s61
      %s63 = sshll.u32 [#allocation8], 4
      %s64 = int_to_ptr.vmem [resolvable:$true] %s63
      %69 = dma.hbm_to_vmem [thread:$0]  %s5, 8192, %s64, [#allocation9], 512, 512, 32
    $region25: #{tpu_custom_call.1} parent=1 // pred_fallthru
      _
    // Predicated region
    $region26: #{tpu_custom_call.1} parent=1 // pred_check
      _
    $region27: #{tpu_custom_call.1} parent=1 // pred_check_branch
      %71 = sbr.rel (0) target = $region29
    $region28: #{tpu_custom_call.1} parent=1 // pred_region
      _
    $region29: #{tpu_custom_call.1} parent=1 // pred_fallthru
      _
    // Predicated region
    $region30: #{tpu_custom_call.1} parent=1 // pred_check
      _
    $region31: #{tpu_custom_call.1} parent=1 // pred_check_branch
      %73 = sbr.rel (0) target = $region33
    $region32: #{tpu_custom_call.1} parent=1 // pred_region
      %s75 = ssub.s32 16384, 16384
      %76 = vsyncadd [#allocation9], %s75
      %s77 = sshll.u32 [#allocation10], 4
      %s78 = int_to_ptr.vmem [resolvable:$true] %s77
      %83 = dma.hbm_to_vmem [thread:$0]  %s7, 16384, %s78, [#allocation9], 256, 256, 16
    $region33: #{tpu_custom_call.1} parent=1 // pred_fallthru
      _
    // Predicated region
    $region34: #{tpu_custom_call.1} parent=1 // pred_check
      _
    $region35: #{tpu_custom_call.1} parent=1 // pred_check_branch
      %85 = sbr.rel (0) target = $region37
    $region36: #{tpu_custom_call.1} parent=1 // pred_region
      _
    $region37: #{tpu_custom_call.1} parent=1 // pred_fallthru
      _
    // Predicated region
    $region38: #{tpu_custom_call.1} parent=1 // pred_check
      _
    $region39: #{tpu_custom_call.1} parent=1 // pred_check_branch
      %87 = sbr.rel (0) target = $region41
    $region40: #{tpu_custom_call.1} parent=1 // pred_region
      %88 = dma.done [#allocation3], 512
    $region41: #{tpu_custom_call.1} parent=1 // pred_fallthru
      _
    // Predicated region
    $region42: #{tpu_custom_call.1} parent=1 // pred_check
      _
    $region43: #{tpu_custom_call.1} parent=1 // pred_check_branch
      %90 = sbr.rel (0) target = $region45
    $region44: #{tpu_custom_call.1} parent=1 // pred_region
      %91 = dma.done [#allocation6], 16384
    $region45: #{tpu_custom_call.1} parent=1 // pred_fallthru
      _
    // Predicated region
    $region46: #{tpu_custom_call.1} parent=1 // pred_check
      _
    $region47: #{tpu_custom_call.1} parent=1 // pred_check_branch
      %93 = sbr.rel (0) target = $region49
    $region48: #{tpu_custom_call.1} parent=1 // pred_region
      %94 = dma.done [#allocation6], 8192
    $region49: #{tpu_custom_call.1} parent=1 // pred_fallthru
      _
    // Predicated region
    $region50: #{tpu_custom_call.1} parent=1 // pred_check
      _
    $region51: #{tpu_custom_call.1} parent=1 // pred_check_branch
      %96 = sbr.rel (0) target = $region53
    $region52: #{tpu_custom_call.1} parent=1 // pred_region
      %97 = dma.done [#allocation9], 8192
    $region53: #{tpu_custom_call.1} parent=1 // pred_fallthru
      _
    // Predicated region
    $region54: #{tpu_custom_call.1} parent=1 // pred_check
      _
    $region55: #{tpu_custom_call.1} parent=1 // pred_check_branch
      %99 = sbr.rel (0) target = $region57
    $region56: #{tpu_custom_call.1} parent=1 // pred_region
      %100 = dma.done [#allocation9], 16384
    $region57: #{tpu_custom_call.1} parent=1 // pred_fallthru
      _
    %v101 = vld [vmem:[#allocation2] sm:$0xff]
    %v102 = vld [vmem:[#allocation2 + $0x8] sm:$0xff]
    %v103 = vld [vmem:[#allocation2 + $0x10] sm:$0xff]
    %v104 = vld [vmem:[#allocation2 + $0x18] sm:$0xff]
    %v105 = vld [vmem:[#allocation5] sm:$0xff]
    %v106 = vld [vmem:[#allocation5 + $0x8] sm:$0xff]
    %v107 = vld [vmem:[#allocation5 + $0x10] sm:$0xff]
    %v108 = vld [vmem:[#allocation5 + $0x18] sm:$0xff]
    %v109 = vld [vmem:[#allocation5 + $0x20] sm:$0xff]
    %v110 = vld [vmem:[#allocation5 + $0x28] sm:$0xff]
    %v111 = vld [vmem:[#allocation5 + $0x30] sm:$0xff]
    %v112 = vld [vmem:[#allocation5 + $0x38] sm:$0xff]
    %v113 = vld [vmem:[#allocation5 + $0x40] sm:$0xff]
    %v114 = vld [vmem:[#allocation5 + $0x48] sm:$0xff]
    %v115 = vld [vmem:[#allocation5 + $0x50] sm:$0xff]
    %v116 = vld [vmem:[#allocation5 + $0x58] sm:$0xff]
    %v117 = vld [vmem:[#allocation5 + $0x60] sm:$0xff]
    %v118 = vld [vmem:[#allocation5 + $0x68] sm:$0xff]
    %v119 = vld [vmem:[#allocation5 + $0x70] sm:$0xff]
    %v120 = vld [vmem:[#allocation5 + $0x78] sm:$0xff]
    %v121 = vld [vmem:[#allocation5 + $0x80] sm:$0xff]
    %v122 = vld [vmem:[#allocation5 + $0x88] sm:$0xff]
    %v123 = vld [vmem:[#allocation5 + $0x90] sm:$0xff]
    %v124 = vld [vmem:[#allocation5 + $0x98] sm:$0xff]
    %v125 = vld [vmem:[#allocation5 + $0xa0] sm:$0xff]
    %v126 = vld [vmem:[#allocation5 + $0xa8] sm:$0xff]
    %v127 = vld [vmem:[#allocation5 + $0xb0] sm:$0xff]
    %v128 = vld [vmem:[#allocation5 + $0xb8] sm:$0xff]
    %v129 = vld [vmem:[#allocation5 + $0xc0] sm:$0xff]
    %v130 = vld [vmem:[#allocation5 + $0xc8] sm:$0xff]
    %v131 = vld [vmem:[#allocation5 + $0xd0] sm:$0xff]
    %v132 = vld [vmem:[#allocation5 + $0xd8] sm:$0xff]
    %v133 = vld [vmem:[#allocation5 + $0xe0] sm:$0xff]
    %v134 = vld [vmem:[#allocation5 + $0xe8] sm:$0xff]
    %v135 = vld [vmem:[#allocation5 + $0xf0] sm:$0xff]
    %v136 = vld [vmem:[#allocation5 + $0xf8] sm:$0xff]
    %v137 = vld [vmem:[#allocation5 + $0x100] sm:$0xff]
    %v138 = vld [vmem:[#allocation5 + $0x108] sm:$0xff]
    %v139 = vld [vmem:[#allocation5 + $0x110] sm:$0xff]
    %v140 = vld [vmem:[#allocation5 + $0x118] sm:$0xff]
    %v141 = vld [vmem:[#allocation5 + $0x120] sm:$0xff]
    %v142 = vld [vmem:[#allocation5 + $0x128] sm:$0xff]
    %v143 = vld [vmem:[#allocation5 + $0x130] sm:$0xff]
    %v144 = vld [vmem:[#allocation5 + $0x138] sm:$0xff]
    %v145 = vld [vmem:[#allocation5 + $0x140] sm:$0xff]
    %v146 = vld [vmem:[#allocation5 + $0x148] sm:$0xff]
    %v147 = vld [vmem:[#allocation5 + $0x150] sm:$0xff]
    %v148 = vld [vmem:[#allocation5 + $0x158] sm:$0xff]
    %v149 = vld [vmem:[#allocation5 + $0x160] sm:$0xff]
    %v150 = vld [vmem:[#allocation5 + $0x168] sm:$0xff]
    %v151 = vld [vmem:[#allocation5 + $0x170] sm:$0xff]
    %v152 = vld [vmem:[#allocation5 + $0x178] sm:$0xff]
    %v153 = vld [vmem:[#allocation5 + $0x180] sm:$0xff]
    %v154 = vld [vmem:[#allocation5 + $0x188] sm:$0xff]
    %v155 = vld [vmem:[#allocation5 + $0x190] sm:$0xff]
    %v156 = vld [vmem:[#allocation5 + $0x198] sm:$0xff]
    %v157 = vld [vmem:[#allocation5 + $0x1a0] sm:$0xff]
    %v158 = vld [vmem:[#allocation5 + $0x1a8] sm:$0xff]
    %v159 = vld [vmem:[#allocation5 + $0x1b0] sm:$0xff]
    %v160 = vld [vmem:[#allocation5 + $0x1b8] sm:$0xff]
    %v161 = vld [vmem:[#allocation5 + $0x1c0] sm:$0xff]
    %v162 = vld [vmem:[#allocation5 + $0x1c8] sm:$0xff]
    %v163 = vld [vmem:[#allocation5 + $0x1d0] sm:$0xff]
    %v164 = vld [vmem:[#allocation5 + $0x1d8] sm:$0xff]
    %v165 = vld [vmem:[#allocation5 + $0x1e0] sm:$0xff]
    %v166 = vld [vmem:[#allocation5 + $0x1e8] sm:$0xff]
    %v167 = vld [vmem:[#allocation5 + $0x1f0] sm:$0xff]
    %v168 = vld [vmem:[#allocation5 + $0x1f8] sm:$0xff]
    %v169 = vld [vmem:[#allocation5 + $0x200] sm:$0xff]
    %v170 = vld [vmem:[#allocation5 + $0x208] sm:$0xff]
    %v171 = vld [vmem:[#allocation5 + $0x210] sm:$0xff]
    %v172 = vld [vmem:[#allocation5 + $0x218] sm:$0xff]
    %v173 = vld [vmem:[#allocation5 + $0x220] sm:$0xff]
    %v174 = vld [vmem:[#allocation5 + $0x228] sm:$0xff]
    %v175 = vld [vmem:[#allocation5 + $0x230] sm:$0xff]
    %v176 = vld [vmem:[#allocation5 + $0x238] sm:$0xff]
    %v177 = vld [vmem:[#allocation5 + $0x240] sm:$0xff]
    %v178 = vld [vmem:[#allocation5 + $0x248] sm:$0xff]
    %v179 = vld [vmem:[#allocation5 + $0x250] sm:$0xff]
    %v180 = vld [vmem:[#allocation5 + $0x258] sm:$0xff]
    %v181 = vld [vmem:[#allocation5 + $0x260] sm:$0xff]
    %v182 = vld [vmem:[#allocation5 + $0x268] sm:$0xff]
    %v183 = vld [vmem:[#allocation5 + $0x270] sm:$0xff]
    %v184 = vld [vmem:[#allocation5 + $0x278] sm:$0xff]
    %v185 = vld [vmem:[#allocation5 + $0x280] sm:$0xff]
    %v186 = vld [vmem:[#allocation5 + $0x288] sm:$0xff]
    %v187 = vld [vmem:[#allocation5 + $0x290] sm:$0xff]
    %v188 = vld [vmem:[#allocation5 + $0x298] sm:$0xff]
    %v189 = vld [vmem:[#allocation5 + $0x2a0] sm:$0xff]
    %v190 = vld [vmem:[#allocation5 + $0x2a8] sm:$0xff]
    %v191 = vld [vmem:[#allocation5 + $0x2b0] sm:$0xff]
    %v192 = vld [vmem:[#allocation5 + $0x2b8] sm:$0xff]
    %v193 = vld [vmem:[#allocation5 + $0x2c0] sm:$0xff]
    %v194 = vld [vmem:[#allocation5 + $0x2c8] sm:$0xff]
    %v195 = vld [vmem:[#allocation5 + $0x2d0] sm:$0xff]
    %v196 = vld [vmem:[#allocation5 + $0x2d8] sm:$0xff]
    %v197 = vld [vmem:[#allocation5 + $0x2e0] sm:$0xff]
    %v198 = vld [vmem:[#allocation5 + $0x2e8] sm:$0xff]
    %v199 = vld [vmem:[#allocation5 + $0x2f0] sm:$0xff]
    %v200 = vld [vmem:[#allocation5 + $0x2f8] sm:$0xff]
    %v201 = vld [vmem:[#allocation5 + $0x300] sm:$0xff]
    %v202 = vld [vmem:[#allocation5 + $0x308] sm:$0xff]
    %v203 = vld [vmem:[#allocation5 + $0x310] sm:$0xff]
    %v204 = vld [vmem:[#allocation5 + $0x318] sm:$0xff]
    %v205 = vld [vmem:[#allocation5 + $0x320] sm:$0xff]
    %v206 = vld [vmem:[#allocation5 + $0x328] sm:$0xff]
    %v207 = vld [vmem:[#allocation5 + $0x330] sm:$0xff]
    %v208 = vld [vmem:[#allocation5 + $0x338] sm:$0xff]
    %v209 = vld [vmem:[#allocation5 + $0x340] sm:$0xff]
    %v210 = vld [vmem:[#allocation5 + $0x348] sm:$0xff]
    %v211 = vld [vmem:[#allocation5 + $0x350] sm:$0xff]
    %v212 = vld [vmem:[#allocation5 + $0x358] sm:$0xff]
    %v213 = vld [vmem:[#allocation5 + $0x360] sm:$0xff]
    %v214 = vld [vmem:[#allocation5 + $0x368] sm:$0xff]
    %v215 = vld [vmem:[#allocation5 + $0x370] sm:$0xff]
    %v216 = vld [vmem:[#allocation5 + $0x378] sm:$0xff]
    %v217 = vld [vmem:[#allocation5 + $0x380] sm:$0xff]
    %v218 = vld [vmem:[#allocation5 + $0x388] sm:$0xff]
    %v219 = vld [vmem:[#allocation5 + $0x390] sm:$0xff]
    %v220 = vld [vmem:[#allocation5 + $0x398] sm:$0xff]
    %v221 = vld [vmem:[#allocation5 + $0x3a0] sm:$0xff]
    %v222 = vld [vmem:[#allocation5 + $0x3a8] sm:$0xff]
    %v223 = vld [vmem:[#allocation5 + $0x3b0] sm:$0xff]
    %v224 = vld [vmem:[#allocation5 + $0x3b8] sm:$0xff]
    %v225 = vld [vmem:[#allocation5 + $0x3c0] sm:$0xff]
    %v226 = vld [vmem:[#allocation5 + $0x3c8] sm:$0xff]
    %v227 = vld [vmem:[#allocation5 + $0x3d0] sm:$0xff]
    %v228 = vld [vmem:[#allocation5 + $0x3d8] sm:$0xff]
    %v229 = vld [vmem:[#allocation5 + $0x3e0] sm:$0xff]
    %v230 = vld [vmem:[#allocation5 + $0x3e8] sm:$0xff]
    %v231 = vld [vmem:[#allocation5 + $0x3f0] sm:$0xff]
    %v232 = vld [vmem:[#allocation5 + $0x3f8] sm:$0xff]
    %v233 = vld [vmem:[%s2] sm:$0xf]
    %v235 = vlaneseq
    %v236 = vshrl.u32 %v235, 7
    %v237 = vsub.s32 0, %v236
    %v238 = vrot.slane %v233, %v237
    %v239 = vlaneseq
    %v240 = vshrl.u32 %v239, 7
    %v241 = vsub.s32 1, %v240
    %v242 = vrot.slane %v233, %v241
    %v243 = vlaneseq
    %v244 = vshrl.u32 %v243, 7
    %v245 = vsub.s32 2, %v244
    %v246 = vrot.slane %v233, %v245
    %v247 = vlaneseq
    %v248 = vshrl.u32 %v247, 7
    %v249 = vsub.s32 3, %v248
    %v250 = vrot.slane %v233, %v249
    %255 = vmatprep.subr.mxu0 %v106
    %256 = vmatpush1.msra.mxu0 %v105
    %257 = vmatprep.subr.mxu0 %v110
    %258 = vmatpush1.msra.mxu0 %v109
    %259 = vmatprep.subr.mxu0 %v114
    %260 = vmatpush1.msra.mxu0 %v113
    %261 = vmatprep.subr.mxu0 %v118
    %262 = vmatpush1.msra.mxu0 %v117
    %263 = vmatprep.subr.mxu0 %v122
    %264 = vmatpush1.msra.mxu0 %v121
    %265 = vmatprep.subr.mxu0 %v126
    %266 = vmatpush1.msra.mxu0 %v125
    %267 = vmatprep.subr.mxu0 %v130
    %268 = vmatpush1.msra.mxu0 %v129
    %269 = vmatprep.subr.mxu0 %v134
    %270 = vmatpush1.msra.mxu0 %v133
    %271 = vmatprep.subr.mxu0 %v138
    %272 = vmatpush1.msra.mxu0 %v137
    %273 = vmatprep.subr.mxu0 %v142
    %274 = vmatpush1.msra.mxu0 %v141
    %275 = vmatprep.subr.mxu0 %v146
    %276 = vmatpush1.msra.mxu0 %v145
    %277 = vmatprep.subr.mxu0 %v150
    %278 = vmatpush1.msra.mxu0 %v149
    %279 = vmatprep.subr.mxu0 %v154
    %280 = vmatpush1.msra.mxu0 %v153
    %281 = vmatprep.subr.mxu0 %v158
    %282 = vmatpush1.msra.mxu0 %v157
    %283 = vmatprep.subr.mxu0 %v162
    %284 = vmatpush1.msra.mxu0 %v161
    %285 = vmatprep.subr.mxu0 %v166
    %286 = vmatpush1.msra.mxu0 %v165
    %287 = vmatprep.subr.mxu0 %v170
    %288 = vmatpush1.msra.mxu0 %v169
    %289 = vmatprep.subr.mxu0 %v174
    %290 = vmatpush1.msra.mxu0 %v173
    %291 = vmatprep.subr.mxu0 %v178
    %292 = vmatpush1.msra.mxu0 %v177
    %293 = vmatprep.subr.mxu0 %v182
    %294 = vmatpush1.msra.mxu0 %v181
    %295 = vmatprep.subr.mxu0 %v186
    %296 = vmatpush1.msra.mxu0 %v185
    %297 = vmatprep.subr.mxu0 %v190
    %298 = vmatpush1.msra.mxu0 %v189
    %299 = vmatprep.subr.mxu0 %v194
    %300 = vmatpush1.msra.mxu0 %v193
    %301 = vmatprep.subr.mxu0 %v198
    %302 = vmatpush1.msra.mxu0 %v197
    %303 = vmatprep.subr.mxu0 %v202
    %304 = vmatpush1.msra.mxu0 %v201
    %305 = vmatprep.subr.mxu0 %v206
    %306 = vmatpush1.msra.mxu0 %v205
    %307 = vmatprep.subr.mxu0 %v210
    %308 = vmatpush1.msra.mxu0 %v209
    %309 = vmatprep.subr.mxu0 %v214
    %310 = vmatpush1.msra.mxu0 %v213
    %311 = vmatprep.subr.mxu0 %v218
    %312 = vmatpush1.msra.mxu0 %v217
    %313 = vmatprep.subr.mxu0 %v222
    %314 = vmatpush1.msra.mxu0 %v221
    %315 = vmatprep.subr.mxu0 %v226
    %316 = vmatpush1.msra.mxu0 %v225
    %317 = vmatprep.subr.mxu0 %v230
    %318 = vmatpush1.msra.mxu0 %v229
    %319 = vmatprep.mubr.f32.mxu0 %v102
    %320 = vmatmul.mubr.f32.gmra.mrb[0].mxu0 %v101
    %v321 = vpop.f32.mrb[0].mxu0
    %v322 = vadd.f32 %v238, %v321
    %v323 = vpop.f32.mrb[0].mxu0
    %v324 = vadd.f32 %v242, %v323
    %325 = vmatprep.mubr.f32.mxu0 %v104
    %326 = vmatmul.mubr.f32.gmra.mrb[0].mxu0 %v103
    %v327 = vpop.f32.mrb[0].mxu0
    %v328 = vadd.f32 %v238, %v327
    %v329 = vpop.f32.mrb[0].mxu0
    %v330 = vadd.f32 %v242, %v329
    %331 = vdwg.mxu0
    %332 = vmatprep.subr.mxu0 %v108
    %333 = vmatpush1.msra.mxu0 %v107
    %334 = vmatprep.subr.mxu0 %v112
    %335 = vmatpush1.msra.mxu0 %v111
    %336 = vmatprep.subr.mxu0 %v116
    %337 = vmatpush1.msra.mxu0 %v115
    %338 = vmatprep.subr.mxu0 %v120
    %339 = vmatpush1.msra.mxu0 %v119
    %340 = vmatprep.subr.mxu0 %v124
    %341 = vmatpush1.msra.mxu0 %v123
    %342 = vmatprep.subr.mxu0 %v128
    %343 = vmatpush1.msra.mxu0 %v127
    %344 = vmatprep.subr.mxu0 %v132
    %345 = vmatpush1.msra.mxu0 %v131
    %346 = vmatprep.subr.mxu0 %v136
    %347 = vmatpush1.msra.mxu0 %v135
    %348 = vmatprep.subr.mxu0 %v140
    %349 = vmatpush1.msra.mxu0 %v139
    %350 = vmatprep.subr.mxu0 %v144
    %351 = vmatpush1.msra.mxu0 %v143
    %352 = vmatprep.subr.mxu0 %v148
    %353 = vmatpush1.msra.mxu0 %v147
    %354 = vmatprep.subr.mxu0 %v152
    %355 = vmatpush1.msra.mxu0 %v151
    %356 = vmatprep.subr.mxu0 %v156
    %357 = vmatpush1.msra.mxu0 %v155
    %358 = vmatprep.subr.mxu0 %v160
    %359 = vmatpush1.msra.mxu0 %v159
    %360 = vmatprep.subr.mxu0 %v164
    %361 = vmatpush1.msra.mxu0 %v163
    %362 = vmatprep.subr.mxu0 %v168
    %363 = vmatpush1.msra.mxu0 %v167
    %364 = vmatprep.subr.mxu0 %v172
    %365 = vmatpush1.msra.mxu0 %v171
    %366 = vmatprep.subr.mxu0 %v176
    %367 = vmatpush1.msra.mxu0 %v175
    %368 = vmatprep.subr.mxu0 %v180
    %369 = vmatpush1.msra.mxu0 %v179
    %370 = vmatprep.subr.mxu0 %v184
    %371 = vmatpush1.msra.mxu0 %v183
    %372 = vmatprep.subr.mxu0 %v188
    %373 = vmatpush1.msra.mxu0 %v187
    %374 = vmatprep.subr.mxu0 %v192
    %375 = vmatpush1.msra.mxu0 %v191
    %376 = vmatprep.subr.mxu0 %v196
    %377 = vmatpush1.msra.mxu0 %v195
    %378 = vmatprep.subr.mxu0 %v200
    %379 = vmatpush1.msra.mxu0 %v199
    %380 = vmatprep.subr.mxu0 %v204
    %381 = vmatpush1.msra.mxu0 %v203
    %382 = vmatprep.subr.mxu0 %v208
    %383 = vmatpush1.msra.mxu0 %v207
    %384 = vmatprep.subr.mxu0 %v212
    %385 = vmatpush1.msra.mxu0 %v211
    %386 = vmatprep.subr.mxu0 %v216
    %387 = vmatpush1.msra.mxu0 %v215
    %388 = vmatprep.subr.mxu0 %v220
    %389 = vmatpush1.msra.mxu0 %v219
    %390 = vmatprep.subr.mxu0 %v224
    %391 = vmatpush1.msra.mxu0 %v223
    %392 = vmatprep.subr.mxu0 %v228
    %393 = vmatpush1.msra.mxu0 %v227
    %394 = vmatprep.subr.mxu0 %v232
    %395 = vmatpush1.msra.mxu0 %v231
    %396 = vmatprep.mubr.f32.mxu0 %v102
    %397 = vmatmul.mubr.f32.gmra.mrb[0].mxu0 %v101
    %v398 = vpop.f32.mrb[0].mxu0
    %v399 = vadd.f32 %v246, %v398
    %v400 = vpop.f32.mrb[0].mxu0
    %v401 = vadd.f32 %v250, %v400
    %402 = vmatprep.mubr.f32.mxu0 %v104
    %403 = vmatmul.mubr.f32.gmra.mrb[0].mxu0 %v103
    %v404 = vpop.f32.mrb[0].mxu0
    %v405 = vadd.f32 %v246, %v404
    %v406 = vpop.f32.mrb[0].mxu0
    %v407 = vadd.f32 %v250, %v406
    %408 = vdwg.mxu0
    %v409 = vmax.f32 %v322, 0.0
    %v410 = vmax.f32 %v324, 0.0
    %v411 = vmax.f32 %v399, 0.0
    %v412 = vmax.f32 %v401, 0.0
    %v413 = vmax.f32 %v328, 0.0
    %v414 = vmax.f32 %v330, 0.0
    %v415 = vmax.f32 %v405, 0.0
    %v416 = vmax.f32 %v407, 0.0
    %v417 = vld [vmem:[#allocation7] sm:$0xff]
    %v418 = vld [vmem:[#allocation7 + $0x8] sm:$0xff]
    %v419 = vld [vmem:[#allocation7 + $0x10] sm:$0xff]
    %v420 = vld [vmem:[#allocation7 + $0x18] sm:$0xff]
    %v421 = vld [vmem:[#allocation7 + $0x20] sm:$0xff]
    %v422 = vld [vmem:[#allocation7 + $0x28] sm:$0xff]
    %v423 = vld [vmem:[#allocation7 + $0x30] sm:$0xff]
    %v424 = vld [vmem:[#allocation7 + $0x38] sm:$0xff]
    %v425 = vld [vmem:[#allocation7 + $0x40] sm:$0xff]
    %v426 = vld [vmem:[#allocation7 + $0x48] sm:$0xff]
    %v427 = vld [vmem:[#allocation7 + $0x50] sm:$0xff]
    %v428 = vld [vmem:[#allocation7 + $0x58] sm:$0xff]
    %v429 = vld [vmem:[#allocation7 + $0x60] sm:$0xff]
    %v430 = vld [vmem:[#allocation7 + $0x68] sm:$0xff]
    %v431 = vld [vmem:[#allocation7 + $0x70] sm:$0xff]
    %v432 = vld [vmem:[#allocation7 + $0x78] sm:$0xff]
    %v433 = vld [vmem:[#allocation7 + $0x80] sm:$0xff]
    %v434 = vld [vmem:[#allocation7 + $0x88] sm:$0xff]
    %v435 = vld [vmem:[#allocation7 + $0x90] sm:$0xff]
    %v436 = vld [vmem:[#allocation7 + $0x98] sm:$0xff]
    %v437 = vld [vmem:[#allocation7 + $0xa0] sm:$0xff]
    %v438 = vld [vmem:[#allocation7 + $0xa8] sm:$0xff]
    %v439 = vld [vmem:[#allocation7 + $0xb0] sm:$0xff]
    %v440 = vld [vmem:[#allocation7 + $0xb8] sm:$0xff]
    %v441 = vld [vmem:[#allocation7 + $0xc0] sm:$0xff]
    %v442 = vld [vmem:[#allocation7 + $0xc8] sm:$0xff]
    %v443 = vld [vmem:[#allocation7 + $0xd0] sm:$0xff]
    %v444 = vld [vmem:[#allocation7 + $0xd8] sm:$0xff]
    %v445 = vld [vmem:[#allocation7 + $0xe0] sm:$0xff]
    %v446 = vld [vmem:[#allocation7 + $0xe8] sm:$0xff]
    %v447 = vld [vmem:[#allocation7 + $0xf0] sm:$0xff]
    %v448 = vld [vmem:[#allocation7 + $0xf8] sm:$0xff]
    %v449 = vld [vmem:[#allocation7 + $0x100] sm:$0xff]
    %v450 = vld [vmem:[#allocation7 + $0x108] sm:$0xff]
    %v451 = vld [vmem:[#allocation7 + $0x110] sm:$0xff]
    %v452 = vld [vmem:[#allocation7 + $0x118] sm:$0xff]
    %v453 = vld [vmem:[#allocation7 + $0x120] sm:$0xff]
    %v454 = vld [vmem:[#allocation7 + $0x128] sm:$0xff]
    %v455 = vld [vmem:[#allocation7 + $0x130] sm:$0xff]
    %v456 = vld [vmem:[#allocation7 + $0x138] sm:$0xff]
    %v457 = vld [vmem:[#allocation7 + $0x140] sm:$0xff]
    %v458 = vld [vmem:[#allocation7 + $0x148] sm:$0xff]
    %v459 = vld [vmem:[#allocation7 + $0x150] sm:$0xff]
    %v460 = vld [vmem:[#allocation7 + $0x158] sm:$0xff]
    %v461 = vld [vmem:[#allocation7 + $0x160] sm:$0xff]
    %v462 = vld [vmem:[#allocation7 + $0x168] sm:$0xff]
    %v463 = vld [vmem:[#allocation7 + $0x170] sm:$0xff]
    %v464 = vld [vmem:[#allocation7 + $0x178] sm:$0xff]
    %v465 = vld [vmem:[#allocation7 + $0x180] sm:$0xff]
    %v466 = vld [vmem:[#allocation7 + $0x188] sm:$0xff]
    %v467 = vld [vmem:[#allocation7 + $0x190] sm:$0xff]
    %v468 = vld [vmem:[#allocation7 + $0x198] sm:$0xff]
    %v469 = vld [vmem:[#allocation7 + $0x1a0] sm:$0xff]
    %v470 = vld [vmem:[#allocation7 + $0x1a8] sm:$0xff]
    %v471 = vld [vmem:[#allocation7 + $0x1b0] sm:$0xff]
    %v472 = vld [vmem:[#allocation7 + $0x1b8] sm:$0xff]
    %v473 = vld [vmem:[#allocation7 + $0x1c0] sm:$0xff]
    %v474 = vld [vmem:[#allocation7 + $0x1c8] sm:$0xff]
    %v475 = vld [vmem:[#allocation7 + $0x1d0] sm:$0xff]
    %v476 = vld [vmem:[#allocation7 + $0x1d8] sm:$0xff]
    %v477 = vld [vmem:[#allocation7 + $0x1e0] sm:$0xff]
    %v478 = vld [vmem:[#allocation7 + $0x1e8] sm:$0xff]
    %v479 = vld [vmem:[#allocation7 + $0x1f0] sm:$0xff]
    %v480 = vld [vmem:[#allocation7 + $0x1f8] sm:$0xff]
    %v481 = vld [vmem:[%s4] sm:$0x1]
    %v483 = vlaneseq
    %v484 = vshrl.u32 %v483, 7
    %v485 = vsub.s32 0, %v484
    %v486 = vrot.slane %v481, %v485
    %488 = vmatprep.subr.mxu0 0.0
    %489 = vmatpush1.msra.mxu0 %v417
    %490 = vmatprep.subr.mxu0 0.0
    %491 = vmatpush1.msra.mxu0 %v418
    %492 = vmatprep.subr.mxu0 0.0
    %493 = vmatpush1.msra.mxu0 %v419
    %494 = vmatprep.subr.mxu0 0.0
    %495 = vmatpush1.msra.mxu0 %v420
    %496 = vmatprep.subr.mxu0 0.0
    %497 = vmatpush1.msra.mxu0 %v421
    %498 = vmatprep.subr.mxu0 0.0
    %499 = vmatpush1.msra.mxu0 %v422
    %500 = vmatprep.subr.mxu0 0.0
    %501 = vmatpush1.msra.mxu0 %v423
    %502 = vmatprep.subr.mxu0 0.0
    %503 = vmatpush1.msra.mxu0 %v424
    %504 = vmatprep.subr.mxu0 0.0
    %505 = vmatpush1.msra.mxu0 %v425
    %506 = vmatprep.subr.mxu0 0.0
    %507 = vmatpush1.msra.mxu0 %v426
    %508 = vmatprep.subr.mxu0 0.0
    %509 = vmatpush1.msra.mxu0 %v427
    %510 = vmatprep.subr.mxu0 0.0
    %511 = vmatpush1.msra.mxu0 %v428
    %512 = vmatprep.subr.mxu0 0.0
    %513 = vmatpush1.msra.mxu0 %v429
    %514 = vmatprep.subr.mxu0 0.0
    %515 = vmatpush1.msra.mxu0 %v430
    %516 = vmatprep.subr.mxu0 0.0
    %517 = vmatpush1.msra.mxu0 %v431
    %518 = vmatprep.subr.mxu0 0.0
    %519 = vmatpush1.msra.mxu0 %v432
    %520 = vmatprep.subr.mxu0 0.0
    %521 = vmatpush1.msra.mxu0 %v433
    %522 = vmatprep.subr.mxu0 0.0
    %523 = vmatpush1.msra.mxu0 %v434
    %524 = vmatprep.subr.mxu0 0.0
    %525 = vmatpush1.msra.mxu0 %v435
    %526 = vmatprep.subr.mxu0 0.0
    %527 = vmatpush1.msra.mxu0 %v436
    %528 = vmatprep.subr.mxu0 0.0
    %529 = vmatpush1.msra.mxu0 %v437
    %530 = vmatprep.subr.mxu0 0.0
    %531 = vmatpush1.msra.mxu0 %v438
    %532 = vmatprep.subr.mxu0 0.0
    %533 = vmatpush1.msra.mxu0 %v439
    %534 = vmatprep.subr.mxu0 0.0
    %535 = vmatpush1.msra.mxu0 %v440
    %536 = vmatprep.subr.mxu0 0.0
    %537 = vmatpush1.msra.mxu0 %v441
    %538 = vmatprep.subr.mxu0 0.0
    %539 = vmatpush1.msra.mxu0 %v442
    %540 = vmatprep.subr.mxu0 0.0
    %541 = vmatpush1.msra.mxu0 %v443
    %542 = vmatprep.subr.mxu0 0.0
    %543 = vmatpush1.msra.mxu0 %v444
    %544 = vmatprep.subr.mxu0 0.0
    %545 = vmatpush1.msra.mxu0 %v445
    %546 = vmatprep.subr.mxu0 0.0
    %547 = vmatpush1.msra.mxu0 %v446
    %548 = vmatprep.subr.mxu0 0.0
    %549 = vmatpush1.msra.mxu0 %v447
    %550 = vmatprep.subr.mxu0 0.0
    %551 = vmatpush1.msra.mxu0 %v448
    %552 = vmatprep.mubr.f32.mxu0 %v410
    %553 = vmatmul.mubr.f32.gmra.mrb[0].mxu0 %v409
    %v554 = vpop.f32.mrb[0].mxu0
    %v555 = vadd.f32 %v486, %v554
    %v556 = vpop.f32.mrb[0].mxu0
    %557 = vmatprep.mubr.f32.mxu0 %v414
    %558 = vmatmul.mubr.f32.gmra.mrb[0].mxu0 %v413
    %v559 = vpop.f32.mrb[0].mxu0
    %v560 = vadd.f32 %v486, %v559
    %v561 = vpop.f32.mrb[0].mxu0
    %562 = vdwg.mxu0
    %563 = vmatprep.subr.mxu0 0.0
    %564 = vmatpush1.msra.mxu0 %v449
    %565 = vmatprep.subr.mxu0 0.0
    %566 = vmatpush1.msra.mxu0 %v450
    %567 = vmatprep.subr.mxu0 0.0
    %568 = vmatpush1.msra.mxu0 %v451
    %569 = vmatprep.subr.mxu0 0.0
    %570 = vmatpush1.msra.mxu0 %v452
    %571 = vmatprep.subr.mxu0 0.0
    %572 = vmatpush1.msra.mxu0 %v453
    %573 = vmatprep.subr.mxu0 0.0
    %574 = vmatpush1.msra.mxu0 %v454
    %575 = vmatprep.subr.mxu0 0.0
    %576 = vmatpush1.msra.mxu0 %v455
    %577 = vmatprep.subr.mxu0 0.0
    %578 = vmatpush1.msra.mxu0 %v456
    %579 = vmatprep.subr.mxu0 0.0
    %580 = vmatpush1.msra.mxu0 %v457
    %581 = vmatprep.subr.mxu0 0.0
    %582 = vmatpush1.msra.mxu0 %v458
    %583 = vmatprep.subr.mxu0 0.0
    %584 = vmatpush1.msra.mxu0 %v459
    %585 = vmatprep.subr.mxu0 0.0
    %586 = vmatpush1.msra.mxu0 %v460
    %587 = vmatprep.subr.mxu0 0.0
    %588 = vmatpush1.msra.mxu0 %v461
    %589 = vmatprep.subr.mxu0 0.0
    %590 = vmatpush1.msra.mxu0 %v462
    %591 = vmatprep.subr.mxu0 0.0
    %592 = vmatpush1.msra.mxu0 %v463
    %593 = vmatprep.subr.mxu0 0.0
    %594 = vmatpush1.msra.mxu0 %v464
    %595 = vmatprep.subr.mxu0 0.0
    %596 = vmatpush1.msra.mxu0 %v465
    %597 = vmatprep.subr.mxu0 0.0
    %598 = vmatpush1.msra.mxu0 %v466
    %599 = vmatprep.subr.mxu0 0.0
    %600 = vmatpush1.msra.mxu0 %v467
    %601 = vmatprep.subr.mxu0 0.0
    %602 = vmatpush1.msra.mxu0 %v468
    %603 = vmatprep.subr.mxu0 0.0
    %604 = vmatpush1.msra.mxu0 %v469
    %605 = vmatprep.subr.mxu0 0.0
    %606 = vmatpush1.msra.mxu0 %v470
    %607 = vmatprep.subr.mxu0 0.0
    %608 = vmatpush1.msra.mxu0 %v471
    %609 = vmatprep.subr.mxu0 0.0
    %610 = vmatpush1.msra.mxu0 %v472
    %611 = vmatprep.subr.mxu0 0.0
    %612 = vmatpush1.msra.mxu0 %v473
    %613 = vmatprep.subr.mxu0 0.0
    %614 = vmatpush1.msra.mxu0 %v474
    %615 = vmatprep.subr.mxu0 0.0
    %616 = vmatpush1.msra.mxu0 %v475
    %617 = vmatprep.subr.mxu0 0.0
    %618 = vmatpush1.msra.mxu0 %v476
    %619 = vmatprep.subr.mxu0 0.0
    %620 = vmatpush1.msra.mxu0 %v477
    %621 = vmatprep.subr.mxu0 0.0
    %622 = vmatpush1.msra.mxu0 %v478
    %623 = vmatprep.subr.mxu0 0.0
    %624 = vmatpush1.msra.mxu0 %v479
    %625 = vmatprep.subr.mxu0 0.0
    %626 = vmatpush1.msra.mxu0 %v480
    %627 = vmatprep.mubr.f32.mxu0 %v412
    %628 = vmatmul.mubr.f32.gmra.mrb[0].mxu0 %v411
    %v629 = vpop.f32.mrb[0].mxu0
    %v630 = vadd.f32 %v555, %v629
    %v631 = vpop.f32.mrb[0].mxu0
    %632 = vmatprep.mubr.f32.mxu0 %v416
    %633 = vmatmul.mubr.f32.gmra.mrb[0].mxu0 %v415
    %v634 = vpop.f32.mrb[0].mxu0
    %v635 = vadd.f32 %v560, %v634
    %v636 = vpop.f32.mrb[0].mxu0
    %637 = vdwg.mxu0
    %v638 = vmax.f32 %v630, 0.0
    %v639 = vmax.f32 %v635, 0.0
    %v640 = vld [vmem:[#allocation8] sm:$0xff]
    %v641 = vld [vmem:[#allocation8 + $0x8] sm:$0xff]
    %v642 = vld [vmem:[#allocation8 + $0x10] sm:$0xff]
    %v643 = vld [vmem:[#allocation8 + $0x18] sm:$0xff]
    %v644 = vld [vmem:[#allocation8 + $0x20] sm:$0xff]
    %v645 = vld [vmem:[#allocation8 + $0x28] sm:$0xff]
    %v646 = vld [vmem:[#allocation8 + $0x30] sm:$0xff]
    %v647 = vld [vmem:[#allocation8 + $0x38] sm:$0xff]
    %v648 = vld [vmem:[#allocation8 + $0x40] sm:$0xff]
    %v649 = vld [vmem:[#allocation8 + $0x48] sm:$0xff]
    %v650 = vld [vmem:[#allocation8 + $0x50] sm:$0xff]
    %v651 = vld [vmem:[#allocation8 + $0x58] sm:$0xff]
    %v652 = vld [vmem:[#allocation8 + $0x60] sm:$0xff]
    %v653 = vld [vmem:[#allocation8 + $0x68] sm:$0xff]
    %v654 = vld [vmem:[#allocation8 + $0x70] sm:$0xff]
    %v655 = vld [vmem:[#allocation8 + $0x78] sm:$0xff]
    %v656 = vld [vmem:[#allocation8 + $0x80] sm:$0xff]
    %v657 = vld [vmem:[#allocation8 + $0x88] sm:$0xff]
    %v658 = vld [vmem:[#allocation8 + $0x90] sm:$0xff]
    %v659 = vld [vmem:[#allocation8 + $0x98] sm:$0xff]
    %v660 = vld [vmem:[#allocation8 + $0xa0] sm:$0xff]
    %v661 = vld [vmem:[#allocation8 + $0xa8] sm:$0xff]
    %v662 = vld [vmem:[#allocation8 + $0xb0] sm:$0xff]
    %v663 = vld [vmem:[#allocation8 + $0xb8] sm:$0xff]
    %v664 = vld [vmem:[#allocation8 + $0xc0] sm:$0xff]
    %v665 = vld [vmem:[#allocation8 + $0xc8] sm:$0xff]
    %v666 = vld [vmem:[#allocation8 + $0xd0] sm:$0xff]
    %v667 = vld [vmem:[#allocation8 + $0xd8] sm:$0xff]
    %v668 = vld [vmem:[#allocation8 + $0xe0] sm:$0xff]
    %v669 = vld [vmem:[#allocation8 + $0xe8] sm:$0xff]
    %v670 = vld [vmem:[#allocation8 + $0xf0] sm:$0xff]
    %v671 = vld [vmem:[#allocation8 + $0xf8] sm:$0xff]
    %v672 = vld [vmem:[#allocation8 + $0x100] sm:$0xff]
    %v673 = vld [vmem:[#allocation8 + $0x108] sm:$0xff]
    %v674 = vld [vmem:[#allocation8 + $0x110] sm:$0xff]
    %v675 = vld [vmem:[#allocation8 + $0x118] sm:$0xff]
    %v676 = vld [vmem:[#allocation8 + $0x120] sm:$0xff]
    %v677 = vld [vmem:[#allocation8 + $0x128] sm:$0xff]
    %v678 = vld [vmem:[#allocation8 + $0x130] sm:$0xff]
    %v679 = vld [vmem:[#allocation8 + $0x138] sm:$0xff]
    %v680 = vld [vmem:[#allocation8 + $0x140] sm:$0xff]
    %v681 = vld [vmem:[#allocation8 + $0x148] sm:$0xff]
    %v682 = vld [vmem:[#allocation8 + $0x150] sm:$0xff]
    %v683 = vld [vmem:[#allocation8 + $0x158] sm:$0xff]
    %v684 = vld [vmem:[#allocation8 + $0x160] sm:$0xff]
    %v685 = vld [vmem:[#allocation8 + $0x168] sm:$0xff]
    %v686 = vld [vmem:[#allocation8 + $0x170] sm:$0xff]
    %v687 = vld [vmem:[#allocation8 + $0x178] sm:$0xff]
    %v688 = vld [vmem:[#allocation8 + $0x180] sm:$0xff]
    %v689 = vld [vmem:[#allocation8 + $0x188] sm:$0xff]
    %v690 = vld [vmem:[#allocation8 + $0x190] sm:$0xff]
    %v691 = vld [vmem:[#allocation8 + $0x198] sm:$0xff]
    %v692 = vld [vmem:[#allocation8 + $0x1a0] sm:$0xff]
    %v693 = vld [vmem:[#allocation8 + $0x1a8] sm:$0xff]
    %v694 = vld [vmem:[#allocation8 + $0x1b0] sm:$0xff]
    %v695 = vld [vmem:[#allocation8 + $0x1b8] sm:$0xff]
    %v696 = vld [vmem:[#allocation8 + $0x1c0] sm:$0xff]
    %v697 = vld [vmem:[#allocation8 + $0x1c8] sm:$0xff]
    %v698 = vld [vmem:[#allocation8 + $0x1d0] sm:$0xff]
    %v699 = vld [vmem:[#allocation8 + $0x1d8] sm:$0xff]
    %v700 = vld [vmem:[#allocation8 + $0x1e0] sm:$0xff]
    %v701 = vld [vmem:[#allocation8 + $0x1e8] sm:$0xff]
    %v702 = vld [vmem:[#allocation8 + $0x1f0] sm:$0xff]
    %v703 = vld [vmem:[#allocation8 + $0x1f8] sm:$0xff]
    %v704 = vld [vmem:[%s6] sm:$0xf]
    %v706 = vlaneseq
    %v707 = vshrl.u32 %v706, 7
    %v708 = vsub.s32 0, %v707
    %v709 = vrot.slane %v704, %v708
    %v710 = vlaneseq
    %v711 = vshrl.u32 %v710, 7
    %v712 = vsub.s32 1, %v711
    %v713 = vrot.slane %v704, %v712
    %v714 = vlaneseq
    %v715 = vshrl.u32 %v714, 7
    %v716 = vsub.s32 2, %v715
    %v717 = vrot.slane %v704, %v716
    %v718 = vlaneseq
    %v719 = vshrl.u32 %v718, 7
    %v720 = vsub.s32 3, %v719
    %v721 = vrot.slane %v704, %v720
    %726 = vmatprep.subr.mxu0 %v641
    %727 = vmatpush1.msra.mxu0 %v640
    %728 = vmatprep.subr.mxu0 %v645
    %729 = vmatpush1.msra.mxu0 %v644
    %730 = vmatprep.subr.mxu0 %v649
    %731 = vmatpush1.msra.mxu0 %v648
    %732 = vmatprep.subr.mxu0 %v653
    %733 = vmatpush1.msra.mxu0 %v652
    %734 = vmatprep.subr.mxu0 %v657
    %735 = vmatpush1.msra.mxu0 %v656
    %736 = vmatprep.subr.mxu0 %v661
    %737 = vmatpush1.msra.mxu0 %v660
    %738 = vmatprep.subr.mxu0 %v665
    %739 = vmatpush1.msra.mxu0 %v664
    %740 = vmatprep.subr.mxu0 %v669
    %741 = vmatpush1.msra.mxu0 %v668
    %742 = vmatprep.subr.mxu0 %v673
    %743 = vmatpush1.msra.mxu0 %v672
    %744 = vmatprep.subr.mxu0 %v677
    %745 = vmatpush1.msra.mxu0 %v676
    %746 = vmatprep.subr.mxu0 %v681
    %747 = vmatpush1.msra.mxu0 %v680
    %748 = vmatprep.subr.mxu0 %v685
    %749 = vmatpush1.msra.mxu0 %v684
    %750 = vmatprep.subr.mxu0 %v689
    %751 = vmatpush1.msra.mxu0 %v688
    %752 = vmatprep.subr.mxu0 %v693
    %753 = vmatpush1.msra.mxu0 %v692
    %754 = vmatprep.subr.mxu0 %v697
    %755 = vmatpush1.msra.mxu0 %v696
    %756 = vmatprep.subr.mxu0 %v701
    %757 = vmatpush1.msra.mxu0 %v700
    %758 = vmatprep.subr.mxu0 0.0
    %759 = vmatpush1.msra.mxu0 0.0
    %760 = vmatprep.subr.mxu0 0.0
    %761 = vmatpush1.msra.mxu0 0.0
    %762 = vmatprep.subr.mxu0 0.0
    %763 = vmatpush1.msra.mxu0 0.0
    %764 = vmatprep.subr.mxu0 0.0
    %765 = vmatpush1.msra.mxu0 0.0
    %766 = vmatprep.subr.mxu0 0.0
    %767 = vmatpush1.msra.mxu0 0.0
    %768 = vmatprep.subr.mxu0 0.0
    %769 = vmatpush1.msra.mxu0 0.0
    %770 = vmatprep.subr.mxu0 0.0
    %771 = vmatpush1.msra.mxu0 0.0
    %772 = vmatprep.subr.mxu0 0.0
    %773 = vmatpush1.msra.mxu0 0.0
    %774 = vmatprep.subr.mxu0 0.0
    %775 = vmatpush1.msra.mxu0 0.0
    %776 = vmatprep.subr.mxu0 0.0
    %777 = vmatpush1.msra.mxu0 0.0
    %778 = vmatprep.subr.mxu0 0.0
    %779 = vmatpush1.msra.mxu0 0.0
    %780 = vmatprep.subr.mxu0 0.0
    %781 = vmatpush1.msra.mxu0 0.0
    %782 = vmatprep.subr.mxu0 0.0
    %783 = vmatpush1.msra.mxu0 0.0
    %784 = vmatprep.subr.mxu0 0.0
    %785 = vmatpush1.msra.mxu0 0.0
    %786 = vmatprep.subr.mxu0 0.0
    %787 = vmatpush1.msra.mxu0 0.0
    %788 = vmatprep.subr.mxu0 0.0
    %789 = vmatpush1.msra.mxu0 0.0
    %790 = vmatprep.mubr.f32.mxu0 0.0
    %791 = vmatmul.mubr.f32.gmra.mrb[0].mxu0 %v638
    %v792 = vpop.f32.mrb[0].mxu0
    %v793 = vadd.f32 %v709, %v792
    %v794 = vpop.f32.mrb[0].mxu0
    %v795 = vadd.f32 %v713, %v794
    %796 = vmatprep.mubr.f32.mxu0 0.0
    %797 = vmatmul.mubr.f32.gmra.mrb[0].mxu0 %v639
    %v798 = vpop.f32.mrb[0].mxu0
    %v799 = vadd.f32 %v709, %v798
    %v800 = vpop.f32.mrb[0].mxu0
    %v801 = vadd.f32 %v713, %v800
    %802 = vdwg.mxu0
    %803 = vmatprep.subr.mxu0 %v643
    %804 = vmatpush1.msra.mxu0 %v642
    %805 = vmatprep.subr.mxu0 %v647
    %806 = vmatpush1.msra.mxu0 %v646
    %807 = vmatprep.subr.mxu0 %v651
    %808 = vmatpush1.msra.mxu0 %v650
    %809 = vmatprep.subr.mxu0 %v655
    %810 = vmatpush1.msra.mxu0 %v654
    %811 = vmatprep.subr.mxu0 %v659
    %812 = vmatpush1.msra.mxu0 %v658
    %813 = vmatprep.subr.mxu0 %v663
    %814 = vmatpush1.msra.mxu0 %v662
    %815 = vmatprep.subr.mxu0 %v667
    %816 = vmatpush1.msra.mxu0 %v666
    %817 = vmatprep.subr.mxu0 %v671
    %818 = vmatpush1.msra.mxu0 %v670
    %819 = vmatprep.subr.mxu0 %v675
    %820 = vmatpush1.msra.mxu0 %v674
    %821 = vmatprep.subr.mxu0 %v679
    %822 = vmatpush1.msra.mxu0 %v678
    %823 = vmatprep.subr.mxu0 %v683
    %824 = vmatpush1.msra.mxu0 %v682
    %825 = vmatprep.subr.mxu0 %v687
    %826 = vmatpush1.msra.mxu0 %v686
    %827 = vmatprep.subr.mxu0 %v691
    %828 = vmatpush1.msra.mxu0 %v690
    %829 = vmatprep.subr.mxu0 %v695
    %830 = vmatpush1.msra.mxu0 %v694
    %831 = vmatprep.subr.mxu0 %v699
    %832 = vmatpush1.msra.mxu0 %v698
    %833 = vmatprep.subr.mxu0 %v703
    %834 = vmatpush1.msra.mxu0 %v702
    %835 = vmatprep.subr.mxu0 0.0
    %836 = vmatpush1.msra.mxu0 0.0
    %837 = vmatprep.subr.mxu0 0.0
    %838 = vmatpush1.msra.mxu0 0.0
    %839 = vmatprep.subr.mxu0 0.0
    %840 = vmatpush1.msra.mxu0 0.0
    %841 = vmatprep.subr.mxu0 0.0
    %842 = vmatpush1.msra.mxu0 0.0
    %843 = vmatprep.subr.mxu0 0.0
    %844 = vmatpush1.msra.mxu0 0.0
    %845 = vmatprep.subr.mxu0 0.0
    %846 = vmatpush1.msra.mxu0 0.0
    %847 = vmatprep.subr.mxu0 0.0
    %848 = vmatpush1.msra.mxu0 0.0
    %849 = vmatprep.subr.mxu0 0.0
    %850 = vmatpush1.msra.mxu0 0.0
    %851 = vmatprep.subr.mxu0 0.0
    %852 = vmatpush1.msra.mxu0 0.0
    %853 = vmatprep.subr.mxu0 0.0
    %854 = vmatpush1.msra.mxu0 0.0
    %855 = vmatprep.subr.mxu0 0.0
    %856 = vmatpush1.msra.mxu0 0.0
    %857 = vmatprep.subr.mxu0 0.0
    %858 = vmatpush1.msra.mxu0 0.0
    %859 = vmatprep.subr.mxu0 0.0
    %860 = vmatpush1.msra.mxu0 0.0
    %861 = vmatprep.subr.mxu0 0.0
    %862 = vmatpush1.msra.mxu0 0.0
    %863 = vmatprep.subr.mxu0 0.0
    %864 = vmatpush1.msra.mxu0 0.0
    %865 = vmatprep.subr.mxu0 0.0
    %866 = vmatpush1.msra.mxu0 0.0
    %867 = vmatprep.mubr.f32.mxu0 0.0
    %868 = vmatmul.mubr.f32.gmra.mrb[0].mxu0 %v638
    %v869 = vpop.f32.mrb[0].mxu0
    %v870 = vadd.f32 %v717, %v869
    %v871 = vpop.f32.mrb[0].mxu0
    %v872 = vadd.f32 %v721, %v871
    %873 = vmatprep.mubr.f32.mxu0 0.0
    %874 = vmatmul.mubr.f32.gmra.mrb[0].mxu0 %v639
    %v875 = vpop.f32.mrb[0].mxu0
    %v876 = vadd.f32 %v717, %v875
    %v877 = vpop.f32.mrb[0].mxu0
    %v878 = vadd.f32 %v721, %v877
    %879 = vdwg.mxu0
    %v880 = vmax.f32 %v793, 0.0
    %v881 = vmax.f32 %v795, 0.0
    %v882 = vmax.f32 %v870, 0.0
    %v883 = vmax.f32 %v872, 0.0
    %v884 = vmax.f32 %v799, 0.0
    %v885 = vmax.f32 %v801, 0.0
    %v886 = vmax.f32 %v876, 0.0
    %v887 = vmax.f32 %v878, 0.0
    %v888 = vld [vmem:[#allocation10] sm:$0xff]
    %v889 = vld [vmem:[#allocation10 + $0x8] sm:$0xff]
    %v890 = vld [vmem:[#allocation10 + $0x10] sm:$0xff]
    %v891 = vld [vmem:[#allocation10 + $0x18] sm:$0xff]
    %v892 = vld [vmem:[#allocation10 + $0x20] sm:$0xff]
    %v893 = vld [vmem:[#allocation10 + $0x28] sm:$0xff]
    %v894 = vld [vmem:[#allocation10 + $0x30] sm:$0xff]
    %v895 = vld [vmem:[#allocation10 + $0x38] sm:$0xff]
    %v896 = vld [vmem:[#allocation10 + $0x40] sm:$0xff]
    %v897 = vld [vmem:[#allocation10 + $0x48] sm:$0xff]
    %v898 = vld [vmem:[#allocation10 + $0x50] sm:$0xff]
    %v899 = vld [vmem:[#allocation10 + $0x58] sm:$0xff]
    %v900 = vld [vmem:[#allocation10 + $0x60] sm:$0xff]
    %v901 = vld [vmem:[#allocation10 + $0x68] sm:$0xff]
    %v902 = vld [vmem:[#allocation10 + $0x70] sm:$0xff]
    %v903 = vld [vmem:[#allocation10 + $0x78] sm:$0xff]
    %v904 = vld [vmem:[#allocation10 + $0x80] sm:$0xff]
    %v905 = vld [vmem:[#allocation10 + $0x88] sm:$0xff]
    %v906 = vld [vmem:[#allocation10 + $0x90] sm:$0xff]
    %v907 = vld [vmem:[#allocation10 + $0x98] sm:$0xff]
    %v908 = vld [vmem:[#allocation10 + $0xa0] sm:$0xff]
    %v909 = vld [vmem:[#allocation10 + $0xa8] sm:$0xff]
    %v910 = vld [vmem:[#allocation10 + $0xb0] sm:$0xff]
    %v911 = vld [vmem:[#allocation10 + $0xb8] sm:$0xff]
    %v912 = vld [vmem:[#allocation10 + $0xc0] sm:$0xff]
    %v913 = vld [vmem:[#allocation10 + $0xc8] sm:$0xff]
    %v914 = vld [vmem:[#allocation10 + $0xd0] sm:$0xff]
    %v915 = vld [vmem:[#allocation10 + $0xd8] sm:$0xff]
    %v916 = vld [vmem:[#allocation10 + $0xe0] sm:$0xff]
    %v917 = vld [vmem:[#allocation10 + $0xe8] sm:$0xff]
    %v918 = vld [vmem:[#allocation10 + $0xf0] sm:$0xff]
    %v919 = vld [vmem:[#allocation10 + $0xf8] sm:$0xff]
    %v920 = vld [vmem:[#allocation10 + $0x100] sm:$0xff]
    %v921 = vld [vmem:[#allocation10 + $0x108] sm:$0xff]
    %v922 = vld [vmem:[#allocation10 + $0x110] sm:$0xff]
    %v923 = vld [vmem:[#allocation10 + $0x118] sm:$0xff]
    %v924 = vld [vmem:[#allocation10 + $0x120] sm:$0xff]
    %v925 = vld [vmem:[#allocation10 + $0x128] sm:$0xff]
    %v926 = vld [vmem:[#allocation10 + $0x130] sm:$0xff]
    %v927 = vld [vmem:[#allocation10 + $0x138] sm:$0xff]
    %v928 = vld [vmem:[#allocation10 + $0x140] sm:$0xff]
    %v929 = vld [vmem:[#allocation10 + $0x148] sm:$0xff]
    %v930 = vld [vmem:[#allocation10 + $0x150] sm:$0xff]
    %v931 = vld [vmem:[#allocation10 + $0x158] sm:$0xff]
    %v932 = vld [vmem:[#allocation10 + $0x160] sm:$0xff]
    %v933 = vld [vmem:[#allocation10 + $0x168] sm:$0xff]
    %v934 = vld [vmem:[#allocation10 + $0x170] sm:$0xff]
    %v935 = vld [vmem:[#allocation10 + $0x178] sm:$0xff]
    %v936 = vld [vmem:[#allocation10 + $0x180] sm:$0xff]
    %v937 = vld [vmem:[#allocation10 + $0x188] sm:$0xff]
    %v938 = vld [vmem:[#allocation10 + $0x190] sm:$0xff]
    %v939 = vld [vmem:[#allocation10 + $0x198] sm:$0xff]
    %v940 = vld [vmem:[#allocation10 + $0x1a0] sm:$0xff]
    %v941 = vld [vmem:[#allocation10 + $0x1a8] sm:$0xff]
    %v942 = vld [vmem:[#allocation10 + $0x1b0] sm:$0xff]
    %v943 = vld [vmem:[#allocation10 + $0x1b8] sm:$0xff]
    %v944 = vld [vmem:[#allocation10 + $0x1c0] sm:$0xff]
    %v945 = vld [vmem:[#allocation10 + $0x1c8] sm:$0xff]
    %v946 = vld [vmem:[#allocation10 + $0x1d0] sm:$0xff]
    %v947 = vld [vmem:[#allocation10 + $0x1d8] sm:$0xff]
    %v948 = vld [vmem:[#allocation10 + $0x1e0] sm:$0xff]
    %v949 = vld [vmem:[#allocation10 + $0x1e8] sm:$0xff]
    %v950 = vld [vmem:[#allocation10 + $0x1f0] sm:$0xff]
    %v951 = vld [vmem:[#allocation10 + $0x1f8] sm:$0xff]
    %v952 = vld [vmem:[#allocation10 + $0x200] sm:$0xff]
    %v953 = vld [vmem:[#allocation10 + $0x208] sm:$0xff]
    %v954 = vld [vmem:[#allocation10 + $0x210] sm:$0xff]
    %v955 = vld [vmem:[#allocation10 + $0x218] sm:$0xff]
    %v956 = vld [vmem:[#allocation10 + $0x220] sm:$0xff]
    %v957 = vld [vmem:[#allocation10 + $0x228] sm:$0xff]
    %v958 = vld [vmem:[#allocation10 + $0x230] sm:$0xff]
    %v959 = vld [vmem:[#allocation10 + $0x238] sm:$0xff]
    %v960 = vld [vmem:[#allocation10 + $0x240] sm:$0xff]
    %v961 = vld [vmem:[#allocation10 + $0x248] sm:$0xff]
    %v962 = vld [vmem:[#allocation10 + $0x250] sm:$0xff]
    %v963 = vld [vmem:[#allocation10 + $0x258] sm:$0xff]
    %v964 = vld [vmem:[#allocation10 + $0x260] sm:$0xff]
    %v965 = vld [vmem:[#allocation10 + $0x268] sm:$0xff]
    %v966 = vld [vmem:[#allocation10 + $0x270] sm:$0xff]
    %v967 = vld [vmem:[#allocation10 + $0x278] sm:$0xff]
    %v968 = vld [vmem:[#allocation10 + $0x280] sm:$0xff]
    %v969 = vld [vmem:[#allocation10 + $0x288] sm:$0xff]
    %v970 = vld [vmem:[#allocation10 + $0x290] sm:$0xff]
    %v971 = vld [vmem:[#allocation10 + $0x298] sm:$0xff]
    %v972 = vld [vmem:[#allocation10 + $0x2a0] sm:$0xff]
    %v973 = vld [vmem:[#allocation10 + $0x2a8] sm:$0xff]
    %v974 = vld [vmem:[#allocation10 + $0x2b0] sm:$0xff]
    %v975 = vld [vmem:[#allocation10 + $0x2b8] sm:$0xff]
    %v976 = vld [vmem:[#allocation10 + $0x2c0] sm:$0xff]
    %v977 = vld [vmem:[#allocation10 + $0x2c8] sm:$0xff]
    %v978 = vld [vmem:[#allocation10 + $0x2d0] sm:$0xff]
    %v979 = vld [vmem:[#allocation10 + $0x2d8] sm:$0xff]
    %v980 = vld [vmem:[#allocation10 + $0x2e0] sm:$0xff]
    %v981 = vld [vmem:[#allocation10 + $0x2e8] sm:$0xff]
    %v982 = vld [vmem:[#allocation10 + $0x2f0] sm:$0xff]
    %v983 = vld [vmem:[#allocation10 + $0x2f8] sm:$0xff]
    %v984 = vld [vmem:[#allocation10 + $0x300] sm:$0xff]
    %v985 = vld [vmem:[#allocation10 + $0x308] sm:$0xff]
    %v986 = vld [vmem:[#allocation10 + $0x310] sm:$0xff]
    %v987 = vld [vmem:[#allocation10 + $0x318] sm:$0xff]
    %v988 = vld [vmem:[#allocation10 + $0x320] sm:$0xff]
    %v989 = vld [vmem:[#allocation10 + $0x328] sm:$0xff]
    %v990 = vld [vmem:[#allocation10 + $0x330] sm:$0xff]
    %v991 = vld [vmem:[#allocation10 + $0x338] sm:$0xff]
    %v992 = vld [vmem:[#allocation10 + $0x340] sm:$0xff]
    %v993 = vld [vmem:[#allocation10 + $0x348] sm:$0xff]
    %v994 = vld [vmem:[#allocation10 + $0x350] sm:$0xff]
    %v995 = vld [vmem:[#allocation10 + $0x358] sm:$0xff]
    %v996 = vld [vmem:[#allocation10 + $0x360] sm:$0xff]
    %v997 = vld [vmem:[#allocation10 + $0x368] sm:$0xff]
    %v998 = vld [vmem:[#allocation10 + $0x370] sm:$0xff]
    %v999 = vld [vmem:[#allocation10 + $0x378] sm:$0xff]
    %v1000 = vld [vmem:[#allocation10 + $0x380] sm:$0xff]
    %v1001 = vld [vmem:[#allocation10 + $0x388] sm:$0xff]
    %v1002 = vld [vmem:[#allocation10 + $0x390] sm:$0xff]
    %v1003 = vld [vmem:[#allocation10 + $0x398] sm:$0xff]
    %v1004 = vld [vmem:[#allocation10 + $0x3a0] sm:$0xff]
    %v1005 = vld [vmem:[#allocation10 + $0x3a8] sm:$0xff]
    %v1006 = vld [vmem:[#allocation10 + $0x3b0] sm:$0xff]
    %v1007 = vld [vmem:[#allocation10 + $0x3b8] sm:$0xff]
    %v1008 = vld [vmem:[#allocation10 + $0x3c0] sm:$0xff]
    %v1009 = vld [vmem:[#allocation10 + $0x3c8] sm:$0xff]
    %v1010 = vld [vmem:[#allocation10 + $0x3d0] sm:$0xff]
    %v1011 = vld [vmem:[#allocation10 + $0x3d8] sm:$0xff]
    %v1012 = vld [vmem:[#allocation10 + $0x3e0] sm:$0xff]
    %v1013 = vld [vmem:[#allocation10 + $0x3e8] sm:$0xff]
    %v1014 = vld [vmem:[#allocation10 + $0x3f0] sm:$0xff]
    %v1015 = vld [vmem:[#allocation10 + $0x3f8] sm:$0xff]
    %v1016 = vld [vmem:[%s8] sm:$0x3]
    %v1018 = vlaneseq
    %v1019 = vshrl.u32 %v1018, 7
    %v1020 = vsub.s32 0, %v1019
    %v1021 = vrot.slane %v1016, %v1020
    %v1022 = vlaneseq
    %v1023 = vshrl.u32 %v1022, 7
    %v1024 = vsub.s32 1, %v1023
    %v1025 = vrot.slane %v1016, %v1024
    %1028 = vmatprep.subr.mxu0 %v889
    %1029 = vmatpush1.msra.mxu0 %v888
    %1030 = vmatprep.subr.mxu0 %v891
    %1031 = vmatpush1.msra.mxu0 %v890
    %1032 = vmatprep.subr.mxu0 %v893
    %1033 = vmatpush1.msra.mxu0 %v892
    %1034 = vmatprep.subr.mxu0 %v895
    %1035 = vmatpush1.msra.mxu0 %v894
    %1036 = vmatprep.subr.mxu0 %v897
    %1037 = vmatpush1.msra.mxu0 %v896
    %1038 = vmatprep.subr.mxu0 %v899
    %1039 = vmatpush1.msra.mxu0 %v898
    %1040 = vmatprep.subr.mxu0 %v901
    %1041 = vmatpush1.msra.mxu0 %v900
    %1042 = vmatprep.subr.mxu0 %v903
    %1043 = vmatpush1.msra.mxu0 %v902
    %1044 = vmatprep.subr.mxu0 %v905
    %1045 = vmatpush1.msra.mxu0 %v904
    %1046 = vmatprep.subr.mxu0 %v907
    %1047 = vmatpush1.msra.mxu0 %v906
    %1048 = vmatprep.subr.mxu0 %v909
    %1049 = vmatpush1.msra.mxu0 %v908
    %1050 = vmatprep.subr.mxu0 %v911
    %1051 = vmatpush1.msra.mxu0 %v910
    %1052 = vmatprep.subr.mxu0 %v913
    %1053 = vmatpush1.msra.mxu0 %v912
    %1054 = vmatprep.subr.mxu0 %v915
    %1055 = vmatpush1.msra.mxu0 %v914
    %1056 = vmatprep.subr.mxu0 %v917
    %1057 = vmatpush1.msra.mxu0 %v916
    %1058 = vmatprep.subr.mxu0 %v919
    %1059 = vmatpush1.msra.mxu0 %v918
    %1060 = vmatprep.subr.mxu0 %v921
    %1061 = vmatpush1.msra.mxu0 %v920
    %1062 = vmatprep.subr.mxu0 %v923
    %1063 = vmatpush1.msra.mxu0 %v922
    %1064 = vmatprep.subr.mxu0 %v925
    %1065 = vmatpush1.msra.mxu0 %v924
    %1066 = vmatprep.subr.mxu0 %v927
    %1067 = vmatpush1.msra.mxu0 %v926
    %1068 = vmatprep.subr.mxu0 %v929
    %1069 = vmatpush1.msra.mxu0 %v928
    %1070 = vmatprep.subr.mxu0 %v931
    %1071 = vmatpush1.msra.mxu0 %v930
    %1072 = vmatprep.subr.mxu0 %v933
    %1073 = vmatpush1.msra.mxu0 %v932
    %1074 = vmatprep.subr.mxu0 %v935
    %1075 = vmatpush1.msra.mxu0 %v934
    %1076 = vmatprep.subr.mxu0 %v937
    %1077 = vmatpush1.msra.mxu0 %v936
    %1078 = vmatprep.subr.mxu0 %v939
    %1079 = vmatpush1.msra.mxu0 %v938
    %1080 = vmatprep.subr.mxu0 %v941
    %1081 = vmatpush1.msra.mxu0 %v940
    %1082 = vmatprep.subr.mxu0 %v943
    %1083 = vmatpush1.msra.mxu0 %v942
    %1084 = vmatprep.subr.mxu0 %v945
    %1085 = vmatpush1.msra.mxu0 %v944
    %1086 = vmatprep.subr.mxu0 %v947
    %1087 = vmatpush1.msra.mxu0 %v946
    %1088 = vmatprep.subr.mxu0 %v949
    %1089 = vmatpush1.msra.mxu0 %v948
    %1090 = vmatprep.subr.mxu0 %v951
    %1091 = vmatpush1.msra.mxu0 %v950
    %1092 = vmatprep.mubr.f32.mxu0 %v881
    %1093 = vmatmul.mubr.f32.gmra.mrb[0].mxu0 %v880
    %v1094 = vpop.f32.mrb[0].mxu0
    %v1095 = vadd.f32 %v1021, %v1094
    %v1096 = vpop.f32.mrb[0].mxu0
    %v1097 = vadd.f32 %v1025, %v1096
    %1098 = vmatprep.mubr.f32.mxu0 %v885
    %1099 = vmatmul.mubr.f32.gmra.mrb[0].mxu0 %v884
    %v1100 = vpop.f32.mrb[0].mxu0
    %v1101 = vadd.f32 %v1021, %v1100
    %v1102 = vpop.f32.mrb[0].mxu0
    %v1103 = vadd.f32 %v1025, %v1102
    %1104 = vdwg.mxu0
    %1105 = vmatprep.subr.mxu0 %v953
    %1106 = vmatpush1.msra.mxu0 %v952
    %1107 = vmatprep.subr.mxu0 %v955
    %1108 = vmatpush1.msra.mxu0 %v954
    %1109 = vmatprep.subr.mxu0 %v957
    %1110 = vmatpush1.msra.mxu0 %v956
    %1111 = vmatprep.subr.mxu0 %v959
    %1112 = vmatpush1.msra.mxu0 %v958
    %1113 = vmatprep.subr.mxu0 %v961
    %1114 = vmatpush1.msra.mxu0 %v960
    %1115 = vmatprep.subr.mxu0 %v963
    %1116 = vmatpush1.msra.mxu0 %v962
    %1117 = vmatprep.subr.mxu0 %v965
    %1118 = vmatpush1.msra.mxu0 %v964
    %1119 = vmatprep.subr.mxu0 %v967
    %1120 = vmatpush1.msra.mxu0 %v966
    %1121 = vmatprep.subr.mxu0 %v969
    %1122 = vmatpush1.msra.mxu0 %v968
    %1123 = vmatprep.subr.mxu0 %v971
    %1124 = vmatpush1.msra.mxu0 %v970
    %1125 = vmatprep.subr.mxu0 %v973
    %1126 = vmatpush1.msra.mxu0 %v972
    %1127 = vmatprep.subr.mxu0 %v975
    %1128 = vmatpush1.msra.mxu0 %v974
    %1129 = vmatprep.subr.mxu0 %v977
    %1130 = vmatpush1.msra.mxu0 %v976
    %1131 = vmatprep.subr.mxu0 %v979
    %1132 = vmatpush1.msra.mxu0 %v978
    %1133 = vmatprep.subr.mxu0 %v981
    %1134 = vmatpush1.msra.mxu0 %v980
    %1135 = vmatprep.subr.mxu0 %v983
    %1136 = vmatpush1.msra.mxu0 %v982
    %1137 = vmatprep.subr.mxu0 %v985
    %1138 = vmatpush1.msra.mxu0 %v984
    %1139 = vmatprep.subr.mxu0 %v987
    %1140 = vmatpush1.msra.mxu0 %v986
    %1141 = vmatprep.subr.mxu0 %v989
    %1142 = vmatpush1.msra.mxu0 %v988
    %1143 = vmatprep.subr.mxu0 %v991
    %1144 = vmatpush1.msra.mxu0 %v990
    %1145 = vmatprep.subr.mxu0 %v993
    %1146 = vmatpush1.msra.mxu0 %v992
    %1147 = vmatprep.subr.mxu0 %v995
    %1148 = vmatpush1.msra.mxu0 %v994
    %1149 = vmatprep.subr.mxu0 %v997
    %1150 = vmatpush1.msra.mxu0 %v996
    %1151 = vmatprep.subr.mxu0 %v999
    %1152 = vmatpush1.msra.mxu0 %v998
    %1153 = vmatprep.subr.mxu0 %v1001
    %1154 = vmatpush1.msra.mxu0 %v1000
    %1155 = vmatprep.subr.mxu0 %v1003
    %1156 = vmatpush1.msra.mxu0 %v1002
    %1157 = vmatprep.subr.mxu0 %v1005
    %1158 = vmatpush1.msra.mxu0 %v1004
    %1159 = vmatprep.subr.mxu0 %v1007
    %1160 = vmatpush1.msra.mxu0 %v1006
    %1161 = vmatprep.subr.mxu0 %v1009
    %1162 = vmatpush1.msra.mxu0 %v1008
    %1163 = vmatprep.subr.mxu0 %v1011
    %1164 = vmatpush1.msra.mxu0 %v1010
    %1165 = vmatprep.subr.mxu0 %v1013
    %1166 = vmatpush1.msra.mxu0 %v1012
    %1167 = vmatprep.subr.mxu0 %v1015
    %1168 = vmatpush1.msra.mxu0 %v1014
    %1169 = vmatprep.mubr.f32.mxu0 %v883
    %1170 = vmatmul.mubr.f32.gmra.mrb[0].mxu0 %v882
    %v1171 = vpop.f32.mrb[0].mxu0
    %v1172 = vadd.f32 %v1095, %v1171
    %v1173 = vpop.f32.mrb[0].mxu0
    %v1174 = vadd.f32 %v1097, %v1173
    %1175 = vmatprep.mubr.f32.mxu0 %v887
    %1176 = vmatmul.mubr.f32.gmra.mrb[0].mxu0 %v886
    %v1177 = vpop.f32.mrb[0].mxu0
    %v1178 = vadd.f32 %v1101, %v1177
    %v1179 = vpop.f32.mrb[0].mxu0
    %v1180 = vadd.f32 %v1103, %v1179
    %1181 = vdwg.mxu0
    %v1182 = vxor.u32 %v1172, 2147483648
    %v1183 = vxor.u32 %v1174, 2147483648
    %v1184 = vxor.u32 %v1178, 2147483648
    %v1185 = vxor.u32 %v1180, 2147483648
    %v1186 = vmul.f32 %v1182, 1.442695
    %v1187 = vpow.pop %v1186
    %v1188 = vmul.f32 %v1183, 1.442695
    %v1189 = vpow.pop %v1188
    %v1190 = vmul.f32 %v1184, 1.442695
    %v1191 = vpow.pop %v1190
    %v1192 = vmul.f32 %v1185, 1.442695
    %v1193 = vpow.pop %v1192
    %v1194 = vadd.f32 %v1187, 1.0
    %v1195 = vadd.f32 %v1189, 1.0
    %v1196 = vadd.f32 %v1191, 1.0
    %v1197 = vadd.f32 %v1193, 1.0
    %v1198 = vrcp.pop %v1194
    %v1199 = vmul.f32 1.0, %v1198
    %v1200 = vrcp.pop %v1195
    %v1201 = vmul.f32 1.0, %v1200
    %v1202 = vrcp.pop %v1196
    %v1203 = vmul.f32 1.0, %v1202
    %v1204 = vrcp.pop %v1197
    %v1205 = vmul.f32 1.0, %v1204
    %1206 = vst [vmem:[#allocation11] sm:$0xff] %v1199
    %1207 = vst [vmem:[#allocation11 + $0x8] sm:$0xff] %v1201
    %1208 = vst [vmem:[#allocation11 + $0x10] sm:$0xff] %v1203
    %1209 = vst [vmem:[#allocation11 + $0x18] sm:$0xff] %v1205
    // Predicated region
    $region58: #{tpu_custom_call.1} parent=1 // pred_check
      _
    $region59: #{tpu_custom_call.1} parent=1 // pred_check_branch
      %1211 = sbr.rel (0) target = $region61
    $region60: #{tpu_custom_call.1} parent=1 // pred_region
      %s1213 = ssub.s32 512, 512
      %1214 = vsyncadd [#allocation4], %s1213
      %s1215 = sshll.u32 [#allocation11], 4
      %s1216 = int_to_ptr.vmem [resolvable:$true] %s1215
      %1221 = dma.vmem_to_hbm [thread:$0]  %s1216, 512, %s9, [#allocation4], 256, 256, 16
    $region61: #{tpu_custom_call.1} parent=1 // pred_fallthru
      _
    // Predicated region
    $region62: #{tpu_custom_call.1} parent=1 // pred_check
      _
    $region63: #{tpu_custom_call.1} parent=1 // pred_check_branch
      %1223 = sbr.rel (0) target = $region65
    $region64: #{tpu_custom_call.1} parent=1 // pred_region
      %1224 = dma.done [#allocation4], 512
    $region65: #{tpu_custom_call.1} parent=1 // pred_fallthru
      _
    %1225 = vsyncpa [#allocation3], 1
    %1226 = vsyncpa [#allocation6], 1
    %1227 = vsyncpa [#allocation9], 1
    %1228 = vsyncpa [#allocation4], 1

// kernel: tpu_custom_call.1
$region0: #{tpu_custom_call.1}
  #allocation0 [shape = 'u32[]', space=smem, size = 0x4, offset = 0x4, fixed_abs, tag = 'smem constant byte address 0x4 - core index']
  #allocation1 [shape = 'u32[144,128]{1,0:T(1,128)}', space=vmem, size = 0x12000, scoped, tag = 'internal scratch']
  %s0 = inlined_call_operand.hbm [shape: f32[16,256], index: 0, kind: input, shape index: {}]
  %s1 = inlined_call_operand.hbm [shape: f32[256,512], index: 1, kind: input, shape index: {}]
  %s2 = inlined_call_operand.vmem [shape: f32[1,512], index: 2, kind: input, shape index: {}]
  %s3 = inlined_call_operand.hbm [shape: f32[512,128], index: 3, kind: input, shape index: {}]
  %s4 = inlined_call_operand.vmem [shape: f32[1,128], index: 4, kind: input, shape index: {}]
  %s5 = inlined_call_operand.hbm [shape: f32[128,512], index: 5, kind: input, shape index: {}]
  %s6 = inlined_call_operand.vmem [shape: f32[1,512], index: 6, kind: input, shape index: {}]
  %s7 = inlined_call_operand.hbm [shape: f32[512,256], index: 7, kind: input, shape index: {}]
  %s8 = inlined_call_operand.vmem [shape: f32[1,256], index: 8, kind: input, shape index: {}]
  %s9 = inlined_call_operand.hbm [shape: f32[16,256], index: 9, kind: output, shape index: {}]
  %s10 = sld [smem:[#allocation0]]
  $region66: #{tpu_custom_call.1} parent=0
    _
  %s12 = ssub.s32 1, %s10
  %s13 = scalar_select 0, %s12, %s10
  $region1: #{tpu_custom_call.1} parent=0
    #allocation2 [shape = 'u8[16384]{0}', space=vmem, size = 0x4000, scoped, tag = 'input window, operand 0, single buffered']
    #allocation3 [shape = 's32[1]{0}', space=sflag, size = 0x4, scoped, tag = 'scoped memory for tpu_custom_call.1']
    #allocation4 [shape = 's32[1]{0}', space=sflag, size = 0x4, scoped, tag = 'scoped memory for tpu_custom_call.1']
    #allocation5 [shape = 'u8[524288]{0}', space=vmem, size = 0x80000, scoped, tag = 'input window, operand 1, single buffered']
    #allocation6 [shape = 's32[1]{0}', space=sflag, size = 0x4, scoped, tag = 'scoped memory for tpu_custom_call.1']
    #allocation7 [shape = 'u8[262144]{0}', space=vmem, size = 0x40000, scoped, tag = 'input window, operand 3, single buffered']
    #allocation8 [shape = 'u8[262144]{0}', space=vmem, size = 0x40000, scoped, tag = 'input window, operand 5, single buffered']
    #allocation9 [shape = 's32[1]{0}', space=sflag, size = 0x4, scoped, tag = 'scoped memory for tpu_custom_call.1']
    #allocation10 [shape = 'u8[524288]{0}', space=vmem, size = 0x80000, scoped, tag = 'input window, operand 7, single buffered']
    #allocation11 [shape = 'u8[16384]{0}', space=vmem, size = 0x4000, scoped, tag = 'output window, operand 0, single buffered']
    %14 = vsyncpa [#allocation3], 0
    %15 = vsyncpa [#allocation6], 0
    %16 = vsyncpa [#allocation9], 0
    %17 = vsyncpa [#allocation4], 0
    // Predicated region
    $region2: #{tpu_custom_call.1} parent=1 // pred_check
      _
    $region3: #{tpu_custom_call.1} parent=1 // pred_check_branch
      %19 = sbr.rel (0) target = $region5
    $region4: #{tpu_custom_call.1} parent=1 // pred_region
      %s21 = ssub.s32 512, 512
      %22 = vsyncadd [#allocation3], %s21
      %s23 = sshll.u32 [#allocation2], 4
      %s24 = int_to_ptr.vmem [resolvable:$true] %s23
      %29 = dma.hbm_to_vmem [thread:$0]  %s0, 512, %s24, [#allocation3], 256, 256, 16
    $region5: #{tpu_custom_call.1} parent=1 // pred_fallthru
      _
    // Predicated region
    $region6: #{tpu_custom_call.1} parent=1 // pred_check
      _
    $region7: #{tpu_custom_call.1} parent=1 // pred_check_branch
      %31 = sbr.rel (0) target = $region9
    $region8: #{tpu_custom_call.1} parent=1 // pred_region
      %s33 = ssub.s32 16384, 16384
      %34 = vsyncadd [#allocation6], %s33
      %s35 = sshll.u32 [#allocation5], 4
      %s36 = int_to_ptr.vmem [resolvable:$true] %s35
      %41 = dma.hbm_to_vmem [thread:$0]  %s1, 16384, %s36, [#allocation6], 512, 512, 32
    $region9: #{tpu_custom_call.1} parent=1 // pred_fallthru
      _
    // Predicated region
    $region10: #{tpu_custom_call.1} parent=1 // pred_check
      _
    $region11: #{tpu_custom_call.1} parent=1 // pred_check_branch
      %43 = sbr.rel (0) target = $region13
    $region12: #{tpu_custom_call.1} parent=1 // pred_region
      _
    $region13: #{tpu_custom_call.1} parent=1 // pred_fallthru
      _
    // Predicated region
    $region14: #{tpu_custom_call.1} parent=1 // pred_check
      _
    $region15: #{tpu_custom_call.1} parent=1 // pred_check_branch
      %45 = sbr.rel (0) target = $region17
    $region16: #{tpu_custom_call.1} parent=1 // pred_region
      %s47 = ssub.s32 8192, 8192
      %48 = vsyncadd [#allocation6], %s47
      %s49 = sshll.u32 [#allocation7], 4
      %s50 = int_to_ptr.vmem [resolvable:$true] %s49
      %55 = dma.hbm_to_vmem [thread:$0]  %s3, 8192, %s50, [#allocation6], 128, 128, 8
    $region17: #{tpu_custom_call.1} parent=1 // pred_fallthru
      _
    // Predicated region
    $region18: #{tpu_custom_call.1} parent=1 // pred_check
      _
    $region19: #{tpu_custom_call.1} parent=1 // pred_check_branch
      %57 = sbr.rel (0) target = $region21
    $region20: #{tpu_custom_call.1} parent=1 // pred_region
      _
    $region21: #{tpu_custom_call.1} parent=1 // pred_fallthru
      _
    // Predicated region
    $region22: #{tpu_custom_call.1} parent=1 // pred_check
      _
    $region23: #{tpu_custom_call.1} parent=1 // pred_check_branch
      %59 = sbr.rel (0) target = $region25
    $region24: #{tpu_custom_call.1} parent=1 // pred_region
      %s61 = ssub.s32 8192, 8192
      %62 = vsyncadd [#allocation9], %s61
      %s63 = sshll.u32 [#allocation8], 4
      %s64 = int_to_ptr.vmem [resolvable:$true] %s63
      %69 = dma.hbm_to_vmem [thread:$0]  %s5, 8192, %s64, [#allocation9], 512, 512, 32
    $region25: #{tpu_custom_call.1} parent=1 // pred_fallthru
      _
    // Predicated region
    $region26: #{tpu_custom_call.1} parent=1 // pred_check
      _
    $region27: #{tpu_custom_call.1} parent=1 // pred_check_branch
      %71 = sbr.rel (0) target = $region29
    $region28: #{tpu_custom_call.1} parent=1 // pred_region
      _
    $region29: #{tpu_custom_call.1} parent=1 // pred_fallthru
      _
    // Predicated region
    $region30: #{tpu_custom_call.1} parent=1 // pred_check
      _
    $region31: #{tpu_custom_call.1} parent=1 // pred_check_branch
      %73 = sbr.rel (0) target = $region33
    $region32: #{tpu_custom_call.1} parent=1 // pred_region
      %s75 = ssub.s32 16384, 16384
      %76 = vsyncadd [#allocation9], %s75
      %s77 = sshll.u32 [#allocation10], 4
      %s78 = int_to_ptr.vmem [resolvable:$true] %s77
      %83 = dma.hbm_to_vmem [thread:$0]  %s7, 16384, %s78, [#allocation9], 256, 256, 16
    $region33: #{tpu_custom_call.1} parent=1 // pred_fallthru
      _
    // Predicated region
    $region34: #{tpu_custom_call.1} parent=1 // pred_check
      _
    $region35: #{tpu_custom_call.1} parent=1 // pred_check_branch
      %85 = sbr.rel (0) target = $region37
    $region36: #{tpu_custom_call.1} parent=1 // pred_region
      _
    $region37: #{tpu_custom_call.1} parent=1 // pred_fallthru
      _
    // Predicated region
    $region38: #{tpu_custom_call.1} parent=1 // pred_check
      _
    $region39: #{tpu_custom_call.1} parent=1 // pred_check_branch
      %87 = sbr.rel (0) target = $region41
    $region40: #{tpu_custom_call.1} parent=1 // pred_region
      %88 = dma.done [#allocation3], 512
    $region41: #{tpu_custom_call.1} parent=1 // pred_fallthru
      _
    // Predicated region
    $region42: #{tpu_custom_call.1} parent=1 // pred_check
      _
    $region43: #{tpu_custom_call.1} parent=1 // pred_check_branch
      %90 = sbr.rel (0) target = $region45
    $region44: #{tpu_custom_call.1} parent=1 // pred_region
      %91 = dma.done [#allocation6], 16384
    $region45: #{tpu_custom_call.1} parent=1 // pred_fallthru
      _
    // Predicated region
    $region46: #{tpu_custom_call.1} parent=1 // pred_check
      _
    $region47: #{tpu_custom_call.1} parent=1 // pred_check_branch
      %93 = sbr.rel (0) target = $region49
    $region48: #{tpu_custom_call.1} parent=1 // pred_region
      %94 = dma.done [#allocation6], 8192
    $region49: #{tpu_custom_call.1} parent=1 // pred_fallthru
      _
    // Predicated region
    $region50: #{tpu_custom_call.1} parent=1 // pred_check
      _
    $region51: #{tpu_custom_call.1} parent=1 // pred_check_branch
      %96 = sbr.rel (0) target = $region53
    $region52: #{tpu_custom_call.1} parent=1 // pred_region
      %97 = dma.done [#allocation9], 8192
    $region53: #{tpu_custom_call.1} parent=1 // pred_fallthru
      _
    // Predicated region
    $region54: #{tpu_custom_call.1} parent=1 // pred_check
      _
    $region55: #{tpu_custom_call.1} parent=1 // pred_check_branch
      %99 = sbr.rel (0) target = $region57
    $region56: #{tpu_custom_call.1} parent=1 // pred_region
      %100 = dma.done [#allocation9], 16384
    $region57: #{tpu_custom_call.1} parent=1 // pred_fallthru
      _
    %v101 = vld [vmem:[#allocation2] sm:$0xff]
    %v102 = vld [vmem:[#allocation2 + $0x8] sm:$0xff]
    %v103 = vld [vmem:[#allocation2 + $0x10] sm:$0xff]
    %v104 = vld [vmem:[#allocation2 + $0x18] sm:$0xff]
    %v105 = vld [vmem:[#allocation5] sm:$0xff]
    %v106 = vld [vmem:[#allocation5 + $0x8] sm:$0xff]
    %v107 = vld [vmem:[#allocation5 + $0x10] sm:$0xff]
    %v108 = vld [vmem:[#allocation5 + $0x18] sm:$0xff]
    %v109 = vld [vmem:[#allocation5 + $0x20] sm:$0xff]
    %v110 = vld [vmem:[#allocation5 + $0x28] sm:$0xff]
    %v111 = vld [vmem:[#allocation5 + $0x30] sm:$0xff]
    %v112 = vld [vmem:[#allocation5 + $0x38] sm:$0xff]
    %v113 = vld [vmem:[#allocation5 + $0x40] sm:$0xff]
    %v114 = vld [vmem:[#allocation5 + $0x48] sm:$0xff]
    %v115 = vld [vmem:[#allocation5 + $0x50] sm:$0xff]
    %v116 = vld [vmem:[#allocation5 + $0x58] sm:$0xff]
    %v117 = vld [vmem:[#allocation5 + $0x60] sm:$0xff]
    %v118 = vld [vmem:[#allocation5 + $0x68] sm:$0xff]
    %v119 = vld [vmem:[#allocation5 + $0x70] sm:$0xff]
    %v120 = vld [vmem:[#allocation5 + $0x78] sm:$0xff]
    %v121 = vld [vmem:[#allocation5 + $0x80] sm:$0xff]
    %v122 = vld [vmem:[#allocation5 + $0x88] sm:$0xff]
    %v123 = vld [vmem:[#allocation5 + $0x90] sm:$0xff]
    %v124 = vld [vmem:[#allocation5 + $0x98] sm:$0xff]
    %v125 = vld [vmem:[#allocation5 + $0xa0] sm:$0xff]
    %v126 = vld [vmem:[#allocation5 + $0xa8] sm:$0xff]
    %v127 = vld [vmem:[#allocation5 + $0xb0] sm:$0xff]
    %v128 = vld [vmem:[#allocation5 + $0xb8] sm:$0xff]
    %v129 = vld [vmem:[#allocation5 + $0xc0] sm:$0xff]
    %v130 = vld [vmem:[#allocation5 + $0xc8] sm:$0xff]
    %v131 = vld [vmem:[#allocation5 + $0xd0] sm:$0xff]
    %v132 = vld [vmem:[#allocation5 + $0xd8] sm:$0xff]
    %v133 = vld [vmem:[#allocation5 + $0xe0] sm:$0xff]
    %v134 = vld [vmem:[#allocation5 + $0xe8] sm:$0xff]
    %v135 = vld [vmem:[#allocation5 + $0xf0] sm:$0xff]
    %v136 = vld [vmem:[#allocation5 + $0xf8] sm:$0xff]
    %v137 = vld [vmem:[#allocation5 + $0x100] sm:$0xff]
    %v138 = vld [vmem:[#allocation5 + $0x108] sm:$0xff]
    %v139 = vld [vmem:[#allocation5 + $0x110] sm:$0xff]
    %v140 = vld [vmem:[#allocation5 + $0x118] sm:$0xff]
    %v141 = vld [vmem:[#allocation5 + $0x120] sm:$0xff]
    %v142 = vld [vmem:[#allocation5 + $0x128] sm:$0xff]
    %v143 = vld [vmem:[#allocation5 + $0x130] sm:$0xff]
    %v144 = vld [vmem:[#allocation5 + $0x138] sm:$0xff]
    %v145 = vld [vmem:[#allocation5 + $0x140] sm:$0xff]
    %v146 = vld [vmem:[#allocation5 + $0x148] sm:$0xff]
    %v147 = vld [vmem:[#allocation5 + $0x150] sm:$0xff]
    %v148 = vld [vmem:[#allocation5 + $0x158] sm:$0xff]
    %v149 = vld [vmem:[#allocation5 + $0x160] sm:$0xff]
    %v150 = vld [vmem:[#allocation5 + $0x168] sm:$0xff]
    %v151 = vld [vmem:[#allocation5 + $0x170] sm:$0xff]
    %v152 = vld [vmem:[#allocation5 + $0x178] sm:$0xff]
    %v153 = vld [vmem:[#allocation5 + $0x180] sm:$0xff]
    %v154 = vld [vmem:[#allocation5 + $0x188] sm:$0xff]
    %v155 = vld [vmem:[#allocation5 + $0x190] sm:$0xff]
    %v156 = vld [vmem:[#allocation5 + $0x198] sm:$0xff]
    %v157 = vld [vmem:[#allocation5 + $0x1a0] sm:$0xff]
    %v158 = vld [vmem:[#allocation5 + $0x1a8] sm:$0xff]
    %v159 = vld [vmem:[#allocation5 + $0x1b0] sm:$0xff]
    %v160 = vld [vmem:[#allocation5 + $0x1b8] sm:$0xff]
    %v161 = vld [vmem:[#allocation5 + $0x1c0] sm:$0xff]
    %v162 = vld [vmem:[#allocation5 + $0x1c8] sm:$0xff]
    %v163 = vld [vmem:[#allocation5 + $0x1d0] sm:$0xff]
    %v164 = vld [vmem:[#allocation5 + $0x1d8] sm:$0xff]
    %v165 = vld [vmem:[#allocation5 + $0x1e0] sm:$0xff]
    %v166 = vld [vmem:[#allocation5 + $0x1e8] sm:$0xff]
    %v167 = vld [vmem:[#allocation5 + $0x1f0] sm:$0xff]
    %v168 = vld [vmem:[#allocation5 + $0x1f8] sm:$0xff]
    %v169 = vld [vmem:[#allocation5 + $0x200] sm:$0xff]
    %v170 = vld [vmem:[#allocation5 + $0x208] sm:$0xff]
    %v171 = vld [vmem:[#allocation5 + $0x210] sm:$0xff]
    %v172 = vld [vmem:[#allocation5 + $0x218] sm:$0xff]
    %v173 = vld [vmem:[#allocation5 + $0x220] sm:$0xff]
    %v174 = vld [vmem:[#allocation5 + $0x228] sm:$0xff]
    %v175 = vld [vmem:[#allocation5 + $0x230] sm:$0xff]
    %v176 = vld [vmem:[#allocation5 + $0x238] sm:$0xff]
    %v177 = vld [vmem:[#allocation5 + $0x240] sm:$0xff]
    %v178 = vld [vmem:[#allocation5 + $0x248] sm:$0xff]
    %v179 = vld [vmem:[#allocation5 + $0x250] sm:$0xff]
    %v180 = vld [vmem:[#allocation5 + $0x258] sm:$0xff]
    %v181 = vld [vmem:[#allocation5 + $0x260] sm:$0xff]
    %v182 = vld [vmem:[#allocation5 + $0x268] sm:$0xff]
    %v183 = vld [vmem:[#allocation5 + $0x270] sm:$0xff]
    %v184 = vld [vmem:[#allocation5 + $0x278] sm:$0xff]
    %v185 = vld [vmem:[#allocation5 + $0x280] sm:$0xff]
    %v186 = vld [vmem:[#allocation5 + $0x288] sm:$0xff]
    %v187 = vld [vmem:[#allocation5 + $0x290] sm:$0xff]
    %v188 = vld [vmem:[#allocation5 + $0x298] sm:$0xff]
    %v189 = vld [vmem:[#allocation5 + $0x2a0] sm:$0xff]
    %v190 = vld [vmem:[#allocation5 + $0x2a8] sm:$0xff]
    %v191 = vld [vmem:[#allocation5 + $0x2b0] sm:$0xff]
    %v192 = vld [vmem:[#allocation5 + $0x2b8] sm:$0xff]
    %v193 = vld [vmem:[#allocation5 + $0x2c0] sm:$0xff]
    %v194 = vld [vmem:[#allocation5 + $0x2c8] sm:$0xff]
    %v195 = vld [vmem:[#allocation5 + $0x2d0] sm:$0xff]
    %v196 = vld [vmem:[#allocation5 + $0x2d8] sm:$0xff]
    %v197 = vld [vmem:[#allocation5 + $0x2e0] sm:$0xff]
    %v198 = vld [vmem:[#allocation5 + $0x2e8] sm:$0xff]
    %v199 = vld [vmem:[#allocation5 + $0x2f0] sm:$0xff]
    %v200 = vld [vmem:[#allocation5 + $0x2f8] sm:$0xff]
    %v201 = vld [vmem:[#allocation5 + $0x300] sm:$0xff]
    %v202 = vld [vmem:[#allocation5 + $0x308] sm:$0xff]
    %v203 = vld [vmem:[#allocation5 + $0x310] sm:$0xff]
    %v204 = vld [vmem:[#allocation5 + $0x318] sm:$0xff]
    %v205 = vld [vmem:[#allocation5 + $0x320] sm:$0xff]
    %v206 = vld [vmem:[#allocation5 + $0x328] sm:$0xff]
    %v207 = vld [vmem:[#allocation5 + $0x330] sm:$0xff]
    %v208 = vld [vmem:[#allocation5 + $0x338] sm:$0xff]
    %v209 = vld [vmem:[#allocation5 + $0x340] sm:$0xff]
    %v210 = vld [vmem:[#allocation5 + $0x348] sm:$0xff]
    %v211 = vld [vmem:[#allocation5 + $0x350] sm:$0xff]
    %v212 = vld [vmem:[#allocation5 + $0x358] sm:$0xff]
    %v213 = vld [vmem:[#allocation5 + $0x360] sm:$0xff]
    %v214 = vld [vmem:[#allocation5 + $0x368] sm:$0xff]
    %v215 = vld [vmem:[#allocation5 + $0x370] sm:$0xff]
    %v216 = vld [vmem:[#allocation5 + $0x378] sm:$0xff]
    %v217 = vld [vmem:[#allocation5 + $0x380] sm:$0xff]
    %v218 = vld [vmem:[#allocation5 + $0x388] sm:$0xff]
    %v219 = vld [vmem:[#allocation5 + $0x390] sm:$0xff]
    %v220 = vld [vmem:[#allocation5 + $0x398] sm:$0xff]
    %v221 = vld [vmem:[#allocation5 + $0x3a0] sm:$0xff]
    %v222 = vld [vmem:[#allocation5 + $0x3a8] sm:$0xff]
    %v223 = vld [vmem:[#allocation5 + $0x3b0] sm:$0xff]
    %v224 = vld [vmem:[#allocation5 + $0x3b8] sm:$0xff]
    %v225 = vld [vmem:[#allocation5 + $0x3c0] sm:$0xff]
    %v226 = vld [vmem:[#allocation5 + $0x3c8] sm:$0xff]
    %v227 = vld [vmem:[#allocation5 + $0x3d0] sm:$0xff]
    %v228 = vld [vmem:[#allocation5 + $0x3d8] sm:$0xff]
    %v229 = vld [vmem:[#allocation5 + $0x3e0] sm:$0xff]
    %v230 = vld [vmem:[#allocation5 + $0x3e8] sm:$0xff]
    %v231 = vld [vmem:[#allocation5 + $0x3f0] sm:$0xff]
    %v232 = vld [vmem:[#allocation5 + $0x3f8] sm:$0xff]
    %v233 = vld [vmem:[%s2] sm:$0xf]
    %v235 = vlaneseq
    %v236 = vshrl.u32 %v235, 7
    %v237 = vsub.s32 0, %v236
    %v238 = vrot.slane %v233, %v237
    %v239 = vlaneseq
    %v240 = vshrl.u32 %v239, 7
    %v241 = vsub.s32 1, %v240
    %v242 = vrot.slane %v233, %v241
    %v243 = vlaneseq
    %v244 = vshrl.u32 %v243, 7
    %v245 = vsub.s32 2, %v244
    %v246 = vrot.slane %v233, %v245
    %v247 = vlaneseq
    %v248 = vshrl.u32 %v247, 7
    %v249 = vsub.s32 3, %v248
    %v250 = vrot.slane %v233, %v249
    %255 = vmatprep.subr.mxu0 %v106
    %256 = vmatpush1.msra.mxu0 %v105
    %257 = vmatprep.subr.mxu0 %v110
    %258 = vmatpush1.msra.mxu0 %v109
    %259 = vmatprep.subr.mxu0 %v114
    %260 = vmatpush1.msra.mxu0 %v113
    %261 = vmatprep.subr.mxu0 %v118
    %262 = vmatpush1.msra.mxu0 %v117
    %263 = vmatprep.subr.mxu0 %v122
    %264 = vmatpush1.msra.mxu0 %v121
    %265 = vmatprep.subr.mxu0 %v126
    %266 = vmatpush1.msra.mxu0 %v125
    %267 = vmatprep.subr.mxu0 %v130
    %268 = vmatpush1.msra.mxu0 %v129
    %269 = vmatprep.subr.mxu0 %v134
    %270 = vmatpush1.msra.mxu0 %v133
    %271 = vmatprep.subr.mxu0 %v138
    %272 = vmatpush1.msra.mxu0 %v137
    %273 = vmatprep.subr.mxu0 %v142
    %274 = vmatpush1.msra.mxu0 %v141
    %275 = vmatprep.subr.mxu0 %v146
    %276 = vmatpush1.msra.mxu0 %v145
    %277 = vmatprep.subr.mxu0 %v150
    %278 = vmatpush1.msra.mxu0 %v149
    %279 = vmatprep.subr.mxu0 %v154
    %280 = vmatpush1.msra.mxu0 %v153
    %281 = vmatprep.subr.mxu0 %v158
    %282 = vmatpush1.msra.mxu0 %v157
    %283 = vmatprep.subr.mxu0 %v162
    %284 = vmatpush1.msra.mxu0 %v161
    %285 = vmatprep.subr.mxu0 %v166
    %286 = vmatpush1.msra.mxu0 %v165
    %287 = vmatprep.subr.mxu0 %v170
    %288 = vmatpush1.msra.mxu0 %v169
    %289 = vmatprep.subr.mxu0 %v174
    %290 = vmatpush1.msra.mxu0 %v173
    %291 = vmatprep.subr.mxu0 %v178
    %292 = vmatpush1.msra.mxu0 %v177
    %293 = vmatprep.subr.mxu0 %v182
    %294 = vmatpush1.msra.mxu0 %v181
    %295 = vmatprep.subr.mxu0 %v186
    %296 = vmatpush1.msra.mxu0 %v185
    %297 = vmatprep.subr.mxu0 %v190
    %298 = vmatpush1.msra.mxu0 %v189
    %299 = vmatprep.subr.mxu0 %v194
    %300 = vmatpush1.msra.mxu0 %v193
    %301 = vmatprep.subr.mxu0 %v198
    %302 = vmatpush1.msra.mxu0 %v197
    %303 = vmatprep.subr.mxu0 %v202
    %304 = vmatpush1.msra.mxu0 %v201
    %305 = vmatprep.subr.mxu0 %v206
    %306 = vmatpush1.msra.mxu0 %v205
    %307 = vmatprep.subr.mxu0 %v210
    %308 = vmatpush1.msra.mxu0 %v209
    %309 = vmatprep.subr.mxu0 %v214
    %310 = vmatpush1.msra.mxu0 %v213
    %311 = vmatprep.subr.mxu0 %v218
    %312 = vmatpush1.msra.mxu0 %v217
    %313 = vmatprep.subr.mxu0 %v222
    %314 = vmatpush1.msra.mxu0 %v221
    %315 = vmatprep.subr.mxu0 %v226
    %316 = vmatpush1.msra.mxu0 %v225
    %317 = vmatprep.subr.mxu0 %v230
    %318 = vmatpush1.msra.mxu0 %v229
    %319 = vmatprep.mubr.f32.mxu0 %v102
    %320 = vmatmul.mubr.f32.gmra.mrb[0].mxu0 %v101
    %v321 = vpop.f32.mrb[0].mxu0
    %v322 = vadd.f32 %v238, %v321
    %v323 = vpop.f32.mrb[0].mxu0
    %v324 = vadd.f32 %v242, %v323
    %325 = vmatprep.mubr.f32.mxu0 %v104
    %326 = vmatmul.mubr.f32.gmra.mrb[0].mxu0 %v103
    %v327 = vpop.f32.mrb[0].mxu0
    %v328 = vadd.f32 %v238, %v327
    %v329 = vpop.f32.mrb[0].mxu0
    %v330 = vadd.f32 %v242, %v329
    %331 = vdwg.mxu0
    %332 = vmatprep.subr.mxu0 %v108
    %333 = vmatpush1.msra.mxu0 %v107
    %334 = vmatprep.subr.mxu0 %v112
    %335 = vmatpush1.msra.mxu0 %v111
    %336 = vmatprep.subr.mxu0 %v116
    %337 = vmatpush1.msra.mxu0 %v115
    %338 = vmatprep.subr.mxu0 %v120
    %339 = vmatpush1.msra.mxu0 %v119
    %340 = vmatprep.subr.mxu0 %v124
    %341 = vmatpush1.msra.mxu0 %v123
    %342 = vmatprep.subr.mxu0 %v128
    %343 = vmatpush1.msra.mxu0 %v127
    %344 = vmatprep.subr.mxu0 %v132
    %345 = vmatpush1.msra.mxu0 %v131
    %346 = vmatprep.subr.mxu0 %v136
    %347 = vmatpush1.msra.mxu0 %v135
    %348 = vmatprep.subr.mxu0 %v140
    %349 = vmatpush1.msra.mxu0 %v139
    %350 = vmatprep.subr.mxu0 %v144
    %351 = vmatpush1.msra.mxu0 %v143
    %352 = vmatprep.subr.mxu0 %v148
    %353 = vmatpush1.msra.mxu0 %v147
    %354 = vmatprep.subr.mxu0 %v152
    %355 = vmatpush1.msra.mxu0 %v151
    %356 = vmatprep.subr.mxu0 %v156
    %357 = vmatpush1.msra.mxu0 %v155
    %358 = vmatprep.subr.mxu0 %v160
    %359 = vmatpush1.msra.mxu0 %v159
    %360 = vmatprep.subr.mxu0 %v164
    %361 = vmatpush1.msra.mxu0 %v163
    %362 = vmatprep.subr.mxu0 %v168
    %363 = vmatpush1.msra.mxu0 %v167
    %364 = vmatprep.subr.mxu0 %v172
    %365 = vmatpush1.msra.mxu0 %v171
    %366 = vmatprep.subr.mxu0 %v176
    %367 = vmatpush1.msra.mxu0 %v175
    %368 = vmatprep.subr.mxu0 %v180
    %369 = vmatpush1.msra.mxu0 %v179
    %370 = vmatprep.subr.mxu0 %v184
    %371 = vmatpush1.msra.mxu0 %v183
    %372 = vmatprep.subr.mxu0 %v188
    %373 = vmatpush1.msra.mxu0 %v187
    %374 = vmatprep.subr.mxu0 %v192
    %375 = vmatpush1.msra.mxu0 %v191
    %376 = vmatprep.subr.mxu0 %v196
    %377 = vmatpush1.msra.mxu0 %v195
    %378 = vmatprep.subr.mxu0 %v200
    %379 = vmatpush1.msra.mxu0 %v199
    %380 = vmatprep.subr.mxu0 %v204
    %381 = vmatpush1.msra.mxu0 %v203
    %382 = vmatprep.subr.mxu0 %v208
    %383 = vmatpush1.msra.mxu0 %v207
    %384 = vmatprep.subr.mxu0 %v212
    %385 = vmatpush1.msra.mxu0 %v211
    %386 = vmatprep.subr.mxu0 %v216
    %387 = vmatpush1.msra.mxu0 %v215
    %388 = vmatprep.subr.mxu0 %v220
    %389 = vmatpush1.msra.mxu0 %v219
    %390 = vmatprep.subr.mxu0 %v224
    %391 = vmatpush1.msra.mxu0 %v223
    %392 = vmatprep.subr.mxu0 %v228
    %393 = vmatpush1.msra.mxu0 %v227
    %394 = vmatprep.subr.mxu0 %v232
    %395 = vmatpush1.msra.mxu0 %v231
    %396 = vmatprep.mubr.f32.mxu0 %v102
    %397 = vmatmul.mubr.f32.gmra.mrb[0].mxu0 %v101
    %v398 = vpop.f32.mrb[0].mxu0
    %v399 = vadd.f32 %v246, %v398
    %v400 = vpop.f32.mrb[0].mxu0
    %v401 = vadd.f32 %v250, %v400
    %402 = vmatprep.mubr.f32.mxu0 %v104
    %403 = vmatmul.mubr.f32.gmra.mrb[0].mxu0 %v103
    %v404 = vpop.f32.mrb[0].mxu0
    %v405 = vadd.f32 %v246, %v404
    %v406 = vpop.f32.mrb[0].mxu0
    %v407 = vadd.f32 %v250, %v406
    %408 = vdwg.mxu0
    %v409 = vmax.f32 %v322, 0.0
    %v410 = vmax.f32 %v324, 0.0
    %v411 = vmax.f32 %v399, 0.0
    %v412 = vmax.f32 %v401, 0.0
    %v413 = vmax.f32 %v328, 0.0
    %v414 = vmax.f32 %v330, 0.0
    %v415 = vmax.f32 %v405, 0.0
    %v416 = vmax.f32 %v407, 0.0
    %v417 = vld [vmem:[#allocation7] sm:$0xff]
    %v418 = vld [vmem:[#allocation7 + $0x8] sm:$0xff]
    %v419 = vld [vmem:[#allocation7 + $0x10] sm:$0xff]
    %v420 = vld [vmem:[#allocation7 + $0x18] sm:$0xff]
    %v421 = vld [vmem:[#allocation7 + $0x20] sm:$0xff]
    %v422 = vld [vmem:[#allocation7 + $0x28] sm:$0xff]
    %v423 = vld [vmem:[#allocation7 + $0x30] sm:$0xff]
    %v424 = vld [vmem:[#allocation7 + $0x38] sm:$0xff]
    %v425 = vld [vmem:[#allocation7 + $0x40] sm:$0xff]
    %v426 = vld [vmem:[#allocation7 + $0x48] sm:$0xff]
    %v427 = vld [vmem:[#allocation7 + $0x50] sm:$0xff]
    %v428 = vld [vmem:[#allocation7 + $0x58] sm:$0xff]
    %v429 = vld [vmem:[#allocation7 + $0x60] sm:$0xff]
    %v430 = vld [vmem:[#allocation7 + $0x68] sm:$0xff]
    %v431 = vld [vmem:[#allocation7 + $0x70] sm:$0xff]
    %v432 = vld [vmem:[#allocation7 + $0x78] sm:$0xff]
    %v433 = vld [vmem:[#allocation7 + $0x80] sm:$0xff]
    %v434 = vld [vmem:[#allocation7 + $0x88] sm:$0xff]
    %v435 = vld [vmem:[#allocation7 + $0x90] sm:$0xff]
    %v436 = vld [vmem:[#allocation7 + $0x98] sm:$0xff]
    %v437 = vld [vmem:[#allocation7 + $0xa0] sm:$0xff]
    %v438 = vld [vmem:[#allocation7 + $0xa8] sm:$0xff]
    %v439 = vld [vmem:[#allocation7 + $0xb0] sm:$0xff]
    %v440 = vld [vmem:[#allocation7 + $0xb8] sm:$0xff]
    %v441 = vld [vmem:[#allocation7 + $0xc0] sm:$0xff]
    %v442 = vld [vmem:[#allocation7 + $0xc8] sm:$0xff]
    %v443 = vld [vmem:[#allocation7 + $0xd0] sm:$0xff]
    %v444 = vld [vmem:[#allocation7 + $0xd8] sm:$0xff]
    %v445 = vld [vmem:[#allocation7 + $0xe0] sm:$0xff]
    %v446 = vld [vmem:[#allocation7 + $0xe8] sm:$0xff]
    %v447 = vld [vmem:[#allocation7 + $0xf0] sm:$0xff]
    %v448 = vld [vmem:[#allocation7 + $0xf8] sm:$0xff]
    %v449 = vld [vmem:[#allocation7 + $0x100] sm:$0xff]
    %v450 = vld [vmem:[#allocation7 + $0x108] sm:$0xff]
    %v451 = vld [vmem:[#allocation7 + $0x110] sm:$0xff]
    %v452 = vld [vmem:[#allocation7 + $0x118] sm:$0xff]
    %v453 = vld [vmem:[#allocation7 + $0x120] sm:$0xff]
    %v454 = vld [vmem:[#allocation7 + $0x128] sm:$0xff]
    %v455 = vld [vmem:[#allocation7 + $0x130] sm:$0xff]
    %v456 = vld [vmem:[#allocation7 + $0x138] sm:$0xff]
    %v457 = vld [vmem:[#allocation7 + $0x140] sm:$0xff]
    %v458 = vld [vmem:[#allocation7 + $0x148] sm:$0xff]
    %v459 = vld [vmem:[#allocation7 + $0x150] sm:$0xff]
    %v460 = vld [vmem:[#allocation7 + $0x158] sm:$0xff]
    %v461 = vld [vmem:[#allocation7 + $0x160] sm:$0xff]
    %v462 = vld [vmem:[#allocation7 + $0x168] sm:$0xff]
    %v463 = vld [vmem:[#allocation7 + $0x170] sm:$0xff]
    %v464 = vld [vmem:[#allocation7 + $0x178] sm:$0xff]
    %v465 = vld [vmem:[#allocation7 + $0x180] sm:$0xff]
    %v466 = vld [vmem:[#allocation7 + $0x188] sm:$0xff]
    %v467 = vld [vmem:[#allocation7 + $0x190] sm:$0xff]
    %v468 = vld [vmem:[#allocation7 + $0x198] sm:$0xff]
    %v469 = vld [vmem:[#allocation7 + $0x1a0] sm:$0xff]
    %v470 = vld [vmem:[#allocation7 + $0x1a8] sm:$0xff]
    %v471 = vld [vmem:[#allocation7 + $0x1b0] sm:$0xff]
    %v472 = vld [vmem:[#allocation7 + $0x1b8] sm:$0xff]
    %v473 = vld [vmem:[#allocation7 + $0x1c0] sm:$0xff]
    %v474 = vld [vmem:[#allocation7 + $0x1c8] sm:$0xff]
    %v475 = vld [vmem:[#allocation7 + $0x1d0] sm:$0xff]
    %v476 = vld [vmem:[#allocation7 + $0x1d8] sm:$0xff]
    %v477 = vld [vmem:[#allocation7 + $0x1e0] sm:$0xff]
    %v478 = vld [vmem:[#allocation7 + $0x1e8] sm:$0xff]
    %v479 = vld [vmem:[#allocation7 + $0x1f0] sm:$0xff]
    %v480 = vld [vmem:[#allocation7 + $0x1f8] sm:$0xff]
    %v481 = vld [vmem:[%s4] sm:$0x1]
    %v483 = vlaneseq
    %v484 = vshrl.u32 %v483, 7
    %v485 = vsub.s32 0, %v484
    %v486 = vrot.slane %v481, %v485
    %488 = vmatprep.subr.mxu0 0.0
    %489 = vmatpush1.msra.mxu0 %v417
    %490 = vmatprep.subr.mxu0 0.0
    %491 = vmatpush1.msra.mxu0 %v418
    %492 = vmatprep.subr.mxu0 0.0
    %493 = vmatpush1.msra.mxu0 %v419
    %494 = vmatprep.subr.mxu0 0.0
    %495 = vmatpush1.msra.mxu0 %v420
    %496 = vmatprep.subr.mxu0 0.0
    %497 = vmatpush1.msra.mxu0 %v421
    %498 = vmatprep.subr.mxu0 0.0
    %499 = vmatpush1.msra.mxu0 %v422
    %500 = vmatprep.subr.mxu0 0.0
    %501 = vmatpush1.msra.mxu0 %v423
    %502 = vmatprep.subr.mxu0 0.0
    %503 = vmatpush1.msra.mxu0 %v424
    %504 = vmatprep.subr.mxu0 0.0
    %505 = vmatpush1.msra.mxu0 %v425
    %506 = vmatprep.subr.mxu0 0.0
    %507 = vmatpush1.msra.mxu0 %v426
    %508 = vmatprep.subr.mxu0 0.0
    %509 = vmatpush1.msra.mxu0 %v427
    %510 = vmatprep.subr.mxu0 0.0
    %511 = vmatpush1.msra.mxu0 %v428
    %512 = vmatprep.subr.mxu0 0.0
    %513 = vmatpush1.msra.mxu0 %v429
    %514 = vmatprep.subr.mxu0 0.0
    %515 = vmatpush1.msra.mxu0 %v430
    %516 = vmatprep.subr.mxu0 0.0
    %517 = vmatpush1.msra.mxu0 %v431
    %518 = vmatprep.subr.mxu0 0.0
    %519 = vmatpush1.msra.mxu0 %v432
    %520 = vmatprep.subr.mxu0 0.0
    %521 = vmatpush1.msra.mxu0 %v433
    %522 = vmatprep.subr.mxu0 0.0
    %523 = vmatpush1.msra.mxu0 %v434
    %524 = vmatprep.subr.mxu0 0.0
    %525 = vmatpush1.msra.mxu0 %v435
    %526 = vmatprep.subr.mxu0 0.0
    %527 = vmatpush1.msra.mxu0 %v436
    %528 = vmatprep.subr.mxu0 0.0
    %529 = vmatpush1.msra.mxu0 %v437
    %530 = vmatprep.subr.mxu0 0.0
    %531 = vmatpush1.msra.mxu0 %v438
    %532 = vmatprep.subr.mxu0 0.0
    %533 = vmatpush1.msra.mxu0 %v439
    %534 = vmatprep.subr.mxu0 0.0
    %535 = vmatpush1.msra.mxu0 %v440
    %536 = vmatprep.subr.mxu0 0.0
    %537 = vmatpush1.msra.mxu0 %v441
    %538 = vmatprep.subr.mxu0 0.0
    %539 = vmatpush1.msra.mxu0 %v442
    %540 = vmatprep.subr.mxu0 0.0
    %541 = vmatpush1.msra.mxu0 %v443
    %542 = vmatprep.subr.mxu0 0.0
    %543 = vmatpush1.msra.mxu0 %v444
    %544 = vmatprep.subr.mxu0 0.0
    %545 = vmatpush1.msra.mxu0 %v445
    %546 = vmatprep.subr.mxu0 0.0
    %547 = vmatpush1.msra.mxu0 %v446
    %548 = vmatprep.subr.mxu0 0.0
    %549 = vmatpush1.msra.mxu0 %v447
    %550 = vmatprep.subr.mxu0 0.0
    %551 = vmatpush1.msra.mxu0 %v448
    %552 = vmatprep.mubr.f32.mxu0 %v410
    %553 = vmatmul.mubr.f32.gmra.mrb[0].mxu0 %v409
    %v554 = vpop.f32.mrb[0].mxu0
    %v555 = vadd.f32 %v486, %v554
    %v556 = vpop.f32.mrb[0].mxu0
    %557 = vmatprep.mubr.f32.mxu0 %v414
    %558 = vmatmul.mubr.f32.gmra.mrb[0].mxu0 %v413
    %v559 = vpop.f32.mrb[0].mxu0
    %v560 = vadd.f32 %v486, %v559
    %v561 = vpop.f32.mrb[0].mxu0
    %562 = vdwg.mxu0
    %563 = vmatprep.subr.mxu0 0.0
    %564 = vmatpush1.msra.mxu0 %v449
    %565 = vmatprep.subr.mxu0 0.0
    %566 = vmatpush1.msra.mxu0 %v450
    %567 = vmatprep.subr.mxu0 0.0
    %568 = vmatpush1.msra.mxu0 %v451
    %569 = vmatprep.subr.mxu0 0.0
    %570 = vmatpush1.msra.mxu0 %v452
    %571 = vmatprep.subr.mxu0 0.0
    %572 = vmatpush1.msra.mxu0 %v453
    %573 = vmatprep.subr.mxu0 0.0
    %574 = vmatpush1.msra.mxu0 %v454
    %575 = vmatprep.subr.mxu0 0.0
    %576 = vmatpush1.msra.mxu0 %v455
    %577 = vmatprep.subr.mxu0 0.0
    %578 = vmatpush1.msra.mxu0 %v456
    %579 = vmatprep.subr.mxu0 0.0
    %580 = vmatpush1.msra.mxu0 %v457
    %581 = vmatprep.subr.mxu0 0.0
    %582 = vmatpush1.msra.mxu0 %v458
    %583 = vmatprep.subr.mxu0 0.0
    %584 = vmatpush1.msra.mxu0 %v459
    %585 = vmatprep.subr.mxu0 0.0
    %586 = vmatpush1.msra.mxu0 %v460
    %587 = vmatprep.subr.mxu0 0.0
    %588 = vmatpush1.msra.mxu0 %v461
    %589 = vmatprep.subr.mxu0 0.0
    %590 = vmatpush1.msra.mxu0 %v462
    %591 = vmatprep.subr.mxu0 0.0
    %592 = vmatpush1.msra.mxu0 %v463
    %593 = vmatprep.subr.mxu0 0.0
    %594 = vmatpush1.msra.mxu0 %v464
    %595 = vmatprep.subr.mxu0 0.0
    %596 = vmatpush1.msra.mxu0 %v465
    %597 = vmatprep.subr.mxu0 0.0
    %598 = vmatpush1.msra.mxu0 %v466
    %599 = vmatprep.subr.mxu0 0.0
    %600 = vmatpush1.msra.mxu0 %v467
    %601 = vmatprep.subr.mxu0 0.0
    %602 = vmatpush1.msra.mxu0 %v468
    %603 = vmatprep.subr.mxu0 0.0
    %604 = vmatpush1.msra.mxu0 %v469
    %605 = vmatprep.subr.mxu0 0.0
    %606 = vmatpush1.msra.mxu0 %v470
    %607 = vmatprep.subr.mxu0 0.0
    %608 = vmatpush1.msra.mxu0 %v471
    %609 = vmatprep.subr.mxu0 0.0
    %610 = vmatpush1.msra.mxu0 %v472
    %611 = vmatprep.subr.mxu0 0.0
    %612 = vmatpush1.msra.mxu0 %v473
    %613 = vmatprep.subr.mxu0 0.0
    %614 = vmatpush1.msra.mxu0 %v474
    %615 = vmatprep.subr.mxu0 0.0
    %616 = vmatpush1.msra.mxu0 %v475
    %617 = vmatprep.subr.mxu0 0.0
    %618 = vmatpush1.msra.mxu0 %v476
    %619 = vmatprep.subr.mxu0 0.0
    %620 = vmatpush1.msra.mxu0 %v477
    %621 = vmatprep.subr.mxu0 0.0
    %622 = vmatpush1.msra.mxu0 %v478
    %623 = vmatprep.subr.mxu0 0.0
    %624 = vmatpush1.msra.mxu0 %v479
    %625 = vmatprep.subr.mxu0 0.0
    %626 = vmatpush1.msra.mxu0 %v480
    %627 = vmatprep.mubr.f32.mxu0 %v412
    %628 = vmatmul.mubr.f32.gmra.mrb[0].mxu0 %v411
    %v629 = vpop.f32.mrb[0].mxu0
    %v630 = vadd.f32 %v555, %v629
    %v631 = vpop.f32.mrb[0].mxu0
    %632 = vmatprep.mubr.f32.mxu0 %v416
    %633 = vmatmul.mubr.f32.gmra.mrb[0].mxu0 %v415
    %v634 = vpop.f32.mrb[0].mxu0
    %v635 = vadd.f32 %v560, %v634
    %v636 = vpop.f32.mrb[0].mxu0
    %637 = vdwg.mxu0
    %v638 = vmax.f32 %v630, 0.0
    %v639 = vmax.f32 %v635, 0.0
    %v640 = vld [vmem:[#allocation8] sm:$0xff]
    %v641 = vld [vmem:[#allocation8 + $0x8] sm:$0xff]
    %v642 = vld [vmem:[#allocation8 + $0x10] sm:$0xff]
    %v643 = vld [vmem:[#allocation8 + $0x18] sm:$0xff]
    %v644 = vld [vmem:[#allocation8 + $0x20] sm:$0xff]
    %v645 = vld [vmem:[#allocation8 + $0x28] sm:$0xff]
    %v646 = vld [vmem:[#allocation8 + $0x30] sm:$0xff]
    %v647 = vld [vmem:[#allocation8 + $0x38] sm:$0xff]
    %v648 = vld [vmem:[#allocation8 + $0x40] sm:$0xff]
    %v649 = vld [vmem:[#allocation8 + $0x48] sm:$0xff]
    %v650 = vld [vmem:[#allocation8 + $0x50] sm:$0xff]
    %v651 = vld [vmem:[#allocation8 + $0x58] sm:$0xff]
    %v652 = vld [vmem:[#allocation8 + $0x60] sm:$0xff]
    %v653 = vld [vmem:[#allocation8 + $0x68] sm:$0xff]
    %v654 = vld [vmem:[#allocation8 + $0x70] sm:$0xff]
    %v655 = vld [vmem:[#allocation8 + $0x78] sm:$0xff]
    %v656 = vld [vmem:[#allocation8 + $0x80] sm:$0xff]
    %v657 = vld [vmem:[#allocation8 + $0x88] sm:$0xff]
    %v658 = vld [vmem:[#allocation8 + $0x90] sm:$0xff]
    %v659 = vld [vmem:[#allocation8 + $0x98] sm:$0xff]
    %v660 = vld [vmem:[#allocation8 + $0xa0] sm:$0xff]
    %v661 = vld [vmem:[#allocation8 + $0xa8] sm:$0xff]
    %v662 = vld [vmem:[#allocation8 + $0xb0] sm:$0xff]
    %v663 = vld [vmem:[#allocation8 + $0xb8] sm:$0xff]
    %v664 = vld [vmem:[#allocation8 + $0xc0] sm:$0xff]
    %v665 = vld [vmem:[#allocation8 + $0xc8] sm:$0xff]
    %v666 = vld [vmem:[#allocation8 + $0xd0] sm:$0xff]
    %v667 = vld [vmem:[#allocation8 + $0xd8] sm:$0xff]
    %v668 = vld [vmem:[#allocation8 + $0xe0] sm:$0xff]
    %v669 = vld [vmem:[#allocation8 + $0xe8] sm:$0xff]
    %v670 = vld [vmem:[#allocation8 + $0xf0] sm:$0xff]
    %v671 = vld [vmem:[#allocation8 + $0xf8] sm:$0xff]
    %v672 = vld [vmem:[#allocation8 + $0x100] sm:$0xff]
    %v673 = vld [vmem:[#allocation8 + $0x108] sm:$0xff]
    %v674 = vld [vmem:[#allocation8 + $0x110] sm:$0xff]
    %v675 = vld [vmem:[#allocation8 + $0x118] sm:$0xff]
    %v676 = vld [vmem:[#allocation8 + $0x120] sm:$0xff]
    %v677 = vld [vmem:[#allocation8 + $0x128] sm:$0xff]
    %v678 = vld [vmem:[#allocation8 + $0x130] sm:$0xff]
    %v679 = vld [vmem:[#allocation8 + $0x138] sm:$0xff]
    %v680 = vld [vmem:[#allocation8 + $0x140] sm:$0xff]
    %v681 = vld [vmem:[#allocation8 + $0x148] sm:$0xff]
    %v682 = vld [vmem:[#allocation8 + $0x150] sm:$0xff]
    %v683 = vld [vmem:[#allocation8 + $0x158] sm:$0xff]
    %v684 = vld [vmem:[#allocation8 + $0x160] sm:$0xff]
    %v685 = vld [vmem:[#allocation8 + $0x168] sm:$0xff]
    %v686 = vld [vmem:[#allocation8 + $0x170] sm:$0xff]
    %v687 = vld [vmem:[#allocation8 + $0x178] sm:$0xff]
    %v688 = vld [vmem:[#allocation8 + $0x180] sm:$0xff]
    %v689 = vld [vmem:[#allocation8 + $0x188] sm:$0xff]
    %v690 = vld [vmem:[#allocation8 + $0x190] sm:$0xff]
    %v691 = vld [vmem:[#allocation8 + $0x198] sm:$0xff]
    %v692 = vld [vmem:[#allocation8 + $0x1a0] sm:$0xff]
    %v693 = vld [vmem:[#allocation8 + $0x1a8] sm:$0xff]
    %v694 = vld [vmem:[#allocation8 + $0x1b0] sm:$0xff]
    %v695 = vld [vmem:[#allocation8 + $0x1b8] sm:$0xff]
    %v696 = vld [vmem:[#allocation8 + $0x1c0] sm:$0xff]
    %v697 = vld [vmem:[#allocation8 + $0x1c8] sm:$0xff]
    %v698 = vld [vmem:[#allocation8 + $0x1d0] sm:$0xff]
    %v699 = vld [vmem:[#allocation8 + $0x1d8] sm:$0xff]
    %v700 = vld [vmem:[#allocation8 + $0x1e0] sm:$0xff]
    %v701 = vld [vmem:[#allocation8 + $0x1e8] sm:$0xff]
    %v702 = vld [vmem:[#allocation8 + $0x1f0] sm:$0xff]
    %v703 = vld [vmem:[#allocation8 + $0x1f8] sm:$0xff]
    %v704 = vld [vmem:[%s6] sm:$0xf]
    %v706 = vlaneseq
    %v707 = vshrl.u32 %v706, 7
    %v708 = vsub.s32 0, %v707
    %v709 = vrot.slane %v704, %v708
    %v710 = vlaneseq
    %v711 = vshrl.u32 %v710, 7
    %v712 = vsub.s32 1, %v711
    %v713 = vrot.slane %v704, %v712
    %v714 = vlaneseq
    %v715 = vshrl.u32 %v714, 7
    %v716 = vsub.s32 2, %v715
    %v717 = vrot.slane %v704, %v716
    %v718 = vlaneseq
    %v719 = vshrl.u32 %v718, 7
    %v720 = vsub.s32 3, %v719
    %v721 = vrot.slane %v704, %v720
    %726 = vmatprep.subr.mxu0 %v641
    %727 = vmatpush1.msra.mxu0 %v640
    %728 = vmatprep.subr.mxu0 %v645
    %729 = vmatpush1.msra.mxu0 %v644
    %730 = vmatprep.subr.mxu0 %v649
    %731 = vmatpush1.msra.mxu0 %v648
    %732 = vmatprep.subr.mxu0 %v653
    %733 = vmatpush1.msra.mxu0 %v652
    %734 = vmatprep.subr.mxu0 %v657
    %735 = vmatpush1.msra.mxu0 %v656
    %736 = vmatprep.subr.mxu0 %v661
    %737 = vmatpush1.msra.mxu0 %v660
    %738 = vmatprep.subr.mxu0 %v665
    %739 = vmatpush1.msra.mxu0 %v664
    %740 = vmatprep.subr.mxu0 %v669
    %741 = vmatpush1.msra.mxu0 %v668
    %742 = vmatprep.subr.mxu0 %v673
    %743 = vmatpush1.msra.mxu0 %v672
    %744 = vmatprep.subr.mxu0 %v677
    %745 = vmatpush1.msra.mxu0 %v676
    %746 = vmatprep.subr.mxu0 %v681
    %747 = vmatpush1.msra.mxu0 %v680
    %748 = vmatprep.subr.mxu0 %v685
    %749 = vmatpush1.msra.mxu0 %v684
    %750 = vmatprep.subr.mxu0 %v689
    %751 = vmatpush1.msra.mxu0 %v688
    %752 = vmatprep.subr.mxu0 %v693
    %753 = vmatpush1.msra.mxu0 %v692
    %754 = vmatprep.subr.mxu0 %v697
    %755 = vmatpush1.msra.mxu0 %v696
    %756 = vmatprep.subr.mxu0 %v701
    %757 = vmatpush1.msra.mxu0 %v700
    %758 = vmatprep.subr.mxu0 0.0
    %759 = vmatpush1.msra.mxu0 0.0
    %760 = vmatprep.subr.mxu0 0.0
    %761 = vmatpush1.msra.mxu0 0.0
    %762 = vmatprep.subr.mxu0 0.0
    %763 = vmatpush1.msra.mxu0 0.0
    %764 = vmatprep.subr.mxu0 0.0
    %765 = vmatpush1.msra.mxu0 0.0
    %766 = vmatprep.subr.mxu0 0.0
    %767 = vmatpush1.msra.mxu0 0.0
    %768 = vmatprep.subr.mxu0 0.0
    %769 = vmatpush1.msra.mxu0 0.0
    %770 = vmatprep.subr.mxu0 0.0
    %771 = vmatpush1.msra.mxu0 0.0
    %772 = vmatprep.subr.mxu0 0.0
    %773 = vmatpush1.msra.mxu0 0.0
    %774 = vmatprep.subr.mxu0 0.0
    %775 = vmatpush1.msra.mxu0 0.0
    %776 = vmatprep.subr.mxu0 0.0
    %777 = vmatpush1.msra.mxu0 0.0
    %778 = vmatprep.subr.mxu0 0.0
    %779 = vmatpush1.msra.mxu0 0.0
    %780 = vmatprep.subr.mxu0 0.0
    %781 = vmatpush1.msra.mxu0 0.0
    %782 = vmatprep.subr.mxu0 0.0
    %783 = vmatpush1.msra.mxu0 0.0
    %784 = vmatprep.subr.mxu0 0.0
    %785 = vmatpush1.msra.mxu0 0.0
    %786 = vmatprep.subr.mxu0 0.0
    %787 = vmatpush1.msra.mxu0 0.0
    %788 = vmatprep.subr.mxu0 0.0
    %789 = vmatpush1.msra.mxu0 0.0
    %790 = vmatprep.mubr.f32.mxu0 0.0
    %791 = vmatmul.mubr.f32.gmra.mrb[0].mxu0 %v638
    %v792 = vpop.f32.mrb[0].mxu0
    %v793 = vadd.f32 %v709, %v792
    %v794 = vpop.f32.mrb[0].mxu0
    %v795 = vadd.f32 %v713, %v794
    %796 = vmatprep.mubr.f32.mxu0 0.0
    %797 = vmatmul.mubr.f32.gmra.mrb[0].mxu0 %v639
    %v798 = vpop.f32.mrb[0].mxu0
    %v799 = vadd.f32 %v709, %v798
    %v800 = vpop.f32.mrb[0].mxu0
    %v801 = vadd.f32 %v713, %v800
    %802 = vdwg.mxu0
    %803 = vmatprep.subr.mxu0 %v643
    %804 = vmatpush1.msra.mxu0 %v642
    %805 = vmatprep.subr.mxu0 %v647
    %806 = vmatpush1.msra.mxu0 %v646
    %807 = vmatprep.subr.mxu0 %v651
    %808 = vmatpush1.msra.mxu0 %v650
    %809 = vmatprep.subr.mxu0 %v655
    %810 = vmatpush1.msra.mxu0 %v654
    %811 = vmatprep.subr.mxu0 %v659
    %812 = vmatpush1.msra.mxu0 %v658
    %813 = vmatprep.subr.mxu0 %v663
    %814 = vmatpush1.msra.mxu0 %v662
    %815 = vmatprep.subr.mxu0 %v667
    %816 = vmatpush1.msra.mxu0 %v666
    %817 = vmatprep.subr.mxu0 %v671
    %818 = vmatpush1.msra.mxu0 %v670
    %819 = vmatprep.subr.mxu0 %v675
    %820 = vmatpush1.msra.mxu0 %v674
    %821 = vmatprep.subr.mxu0 %v679
    %822 = vmatpush1.msra.mxu0 %v678
    %823 = vmatprep.subr.mxu0 %v683
    %824 = vmatpush1.msra.mxu0 %v682
    %825 = vmatprep.subr.mxu0 %v687
    %826 = vmatpush1.msra.mxu0 %v686
    %827 = vmatprep.subr.mxu0 %v691
    %828 = vmatpush1.msra.mxu0 %v690
    %829 = vmatprep.subr.mxu0 %v695
    %830 = vmatpush1.msra.mxu0 %v694
    %831 = vmatprep.subr.mxu0 %v699
    %832 = vmatpush1.msra.mxu0 %v698
    %833 = vmatprep.subr.mxu0 %v703
    %834 = vmatpush1.msra.mxu0 %v702
    %835 = vmatprep.subr.mxu0 0.0
    %836 = vmatpush1.msra.mxu0 0.0
    %837 = vmatprep.subr.mxu0 0.0
    %838 = vmatpush1.msra.mxu0 0.0
    %839 = vmatprep.subr.mxu0 0.0
    %840 = vmatpush1.msra.mxu0 0.0
    %841 = vmatprep.subr.mxu0 0.0
    %842 = vmatpush1.msra.mxu0 0.0
    %843 = vmatprep.subr.mxu0 0.0
    %844 = vmatpush1.msra.mxu0 0.0
    %845 = vmatprep.subr.mxu0 0.0
    %846 = vmatpush1.msra.mxu0 0.0
    %847 = vmatprep.subr.mxu0 0.0
    %848 = vmatpush1.msra.mxu0 0.0
    %849 = vmatprep.subr.mxu0 0.0
    %850 = vmatpush1.msra.mxu0 0.0
    %851 = vmatprep.subr.mxu0 0.0
    %852 = vmatpush1.msra.mxu0 0.0
    %853 = vmatprep.subr.mxu0 0.0
    %854 = vmatpush1.msra.mxu0 0.0
    %855 = vmatprep.subr.mxu0 0.0
    %856 = vmatpush1.msra.mxu0 0.0
    %857 = vmatprep.subr.mxu0 0.0
    %858 = vmatpush1.msra.mxu0 0.0
    %859 = vmatprep.subr.mxu0 0.0
    %860 = vmatpush1.msra.mxu0 0.0
    %861 = vmatprep.subr.mxu0 0.0
    %862 = vmatpush1.msra.mxu0 0.0
    %863 = vmatprep.subr.mxu0 0.0
    %864 = vmatpush1.msra.mxu0 0.0
    %865 = vmatprep.subr.mxu0 0.0
    %866 = vmatpush1.msra.mxu0 0.0
    %867 = vmatprep.mubr.f32.mxu0 0.0
    %868 = vmatmul.mubr.f32.gmra.mrb[0].mxu0 %v638
    %v869 = vpop.f32.mrb[0].mxu0
    %v870 = vadd.f32 %v717, %v869
    %v871 = vpop.f32.mrb[0].mxu0
    %v872 = vadd.f32 %v721, %v871
    %873 = vmatprep.mubr.f32.mxu0 0.0
    %874 = vmatmul.mubr.f32.gmra.mrb[0].mxu0 %v639
    %v875 = vpop.f32.mrb[0].mxu0
    %v876 = vadd.f32 %v717, %v875
    %v877 = vpop.f32.mrb[0].mxu0
    %v878 = vadd.f32 %v721, %v877
    %879 = vdwg.mxu0
    %v880 = vmax.f32 %v793, 0.0
    %v881 = vmax.f32 %v795, 0.0
    %v882 = vmax.f32 %v870, 0.0
    %v883 = vmax.f32 %v872, 0.0
    %v884 = vmax.f32 %v799, 0.0
    %v885 = vmax.f32 %v801, 0.0
    %v886 = vmax.f32 %v876, 0.0
    %v887 = vmax.f32 %v878, 0.0
    %v888 = vld [vmem:[#allocation10] sm:$0xff]
    %v889 = vld [vmem:[#allocation10 + $0x8] sm:$0xff]
    %v890 = vld [vmem:[#allocation10 + $0x10] sm:$0xff]
    %v891 = vld [vmem:[#allocation10 + $0x18] sm:$0xff]
    %v892 = vld [vmem:[#allocation10 + $0x20] sm:$0xff]
    %v893 = vld [vmem:[#allocation10 + $0x28] sm:$0xff]
    %v894 = vld [vmem:[#allocation10 + $0x30] sm:$0xff]
    %v895 = vld [vmem:[#allocation10 + $0x38] sm:$0xff]
    %v896 = vld [vmem:[#allocation10 + $0x40] sm:$0xff]
    %v897 = vld [vmem:[#allocation10 + $0x48] sm:$0xff]
    %v898 = vld [vmem:[#allocation10 + $0x50] sm:$0xff]
    %v899 = vld [vmem:[#allocation10 + $0x58] sm:$0xff]
    %v900 = vld [vmem:[#allocation10 + $0x60] sm:$0xff]
    %v901 = vld [vmem:[#allocation10 + $0x68] sm:$0xff]
    %v902 = vld [vmem:[#allocation10 + $0x70] sm:$0xff]
    %v903 = vld [vmem:[#allocation10 + $0x78] sm:$0xff]
    %v904 = vld [vmem:[#allocation10 + $0x80] sm:$0xff]
    %v905 = vld [vmem:[#allocation10 + $0x88] sm:$0xff]
    %v906 = vld [vmem:[#allocation10 + $0x90] sm:$0xff]
    %v907 = vld [vmem:[#allocation10 + $0x98] sm:$0xff]
    %v908 = vld [vmem:[#allocation10 + $0xa0] sm:$0xff]
    %v909 = vld [vmem:[#allocation10 + $0xa8] sm:$0xff]
    %v910 = vld [vmem:[#allocation10 + $0xb0] sm:$0xff]
    %v911 = vld [vmem:[#allocation10 + $0xb8] sm:$0xff]
    %v912 = vld [vmem:[#allocation10 + $0xc0] sm:$0xff]
    %v913 = vld [vmem:[#allocation10 + $0xc8] sm:$0xff]
    %v914 = vld [vmem:[#allocation10 + $0xd0] sm:$0xff]
    %v915 = vld [vmem:[#allocation10 + $0xd8] sm:$0xff]
    %v916 = vld [vmem:[#allocation10 + $0xe0] sm:$0xff]
    %v917 = vld [vmem:[#allocation10 + $0xe8] sm:$0xff]
    %v918 = vld [vmem:[#allocation10 + $0xf0] sm:$0xff]
    %v919 = vld [vmem:[#allocation10 + $0xf8] sm:$0xff]
    %v920 = vld [vmem:[#allocation10 + $0x100] sm:$0xff]
    %v921 = vld [vmem:[#allocation10 + $0x108] sm:$0xff]
    %v922 = vld [vmem:[#allocation10 + $0x110] sm:$0xff]
    %v923 = vld [vmem:[#allocation10 + $0x118] sm:$0xff]
    %v924 = vld [vmem:[#allocation10 + $0x120] sm:$0xff]
    %v925 = vld [vmem:[#allocation10 + $0x128] sm:$0xff]
    %v926 = vld [vmem:[#allocation10 + $0x130] sm:$0xff]
    %v927 = vld [vmem:[#allocation10 + $0x138] sm:$0xff]
    %v928 = vld [vmem:[#allocation10 + $0x140] sm:$0xff]
    %v929 = vld [vmem:[#allocation10 + $0x148] sm:$0xff]
    %v930 = vld [vmem:[#allocation10 + $0x150] sm:$0xff]
    %v931 = vld [vmem:[#allocation10 + $0x158] sm:$0xff]
    %v932 = vld [vmem:[#allocation10 + $0x160] sm:$0xff]
    %v933 = vld [vmem:[#allocation10 + $0x168] sm:$0xff]
    %v934 = vld [vmem:[#allocation10 + $0x170] sm:$0xff]
    %v935 = vld [vmem:[#allocation10 + $0x178] sm:$0xff]
    %v936 = vld [vmem:[#allocation10 + $0x180] sm:$0xff]
    %v937 = vld [vmem:[#allocation10 + $0x188] sm:$0xff]
    %v938 = vld [vmem:[#allocation10 + $0x190] sm:$0xff]
    %v939 = vld [vmem:[#allocation10 + $0x198] sm:$0xff]
    %v940 = vld [vmem:[#allocation10 + $0x1a0] sm:$0xff]
    %v941 = vld [vmem:[#allocation10 + $0x1a8] sm:$0xff]
    %v942 = vld [vmem:[#allocation10 + $0x1b0] sm:$0xff]
    %v943 = vld [vmem:[#allocation10 + $0x1b8] sm:$0xff]
    %v944 = vld [vmem:[#allocation10 + $0x1c0] sm:$0xff]
    %v945 = vld [vmem:[#allocation10 + $0x1c8] sm:$0xff]
    %v946 = vld [vmem:[#allocation10 + $0x1d0] sm:$0xff]
    %v947 = vld [vmem:[#allocation10 + $0x1d8] sm:$0xff]
    %v948 = vld [vmem:[#allocation10 + $0x1e0] sm:$0xff]
    %v949 = vld [vmem:[#allocation10 + $0x1e8] sm:$0xff]
    %v950 = vld [vmem:[#allocation10 + $0x1f0] sm:$0xff]
    %v951 = vld [vmem:[#allocation10 + $0x1f8] sm:$0xff]
    %v952 = vld [vmem:[#allocation10 + $0x200] sm:$0xff]
    %v953 = vld [vmem:[#allocation10 + $0x208] sm:$0xff]
    %v954 = vld [vmem:[#allocation10 + $0x210] sm:$0xff]
    %v955 = vld [vmem:[#allocation10 + $0x218] sm:$0xff]
    %v956 = vld [vmem:[#allocation10 + $0x220] sm:$0xff]
    %v957 = vld [vmem:[#allocation10 + $0x228] sm:$0xff]
    %v958 = vld [vmem:[#allocation10 + $0x230] sm:$0xff]
    %v959 = vld [vmem:[#allocation10 + $0x238] sm:$0xff]
    %v960 = vld [vmem:[#allocation10 + $0x240] sm:$0xff]
    %v961 = vld [vmem:[#allocation10 + $0x248] sm:$0xff]
    %v962 = vld [vmem:[#allocation10 + $0x250] sm:$0xff]
    %v963 = vld [vmem:[#allocation10 + $0x258] sm:$0xff]
    %v964 = vld [vmem:[#allocation10 + $0x260] sm:$0xff]
    %v965 = vld [vmem:[#allocation10 + $0x268] sm:$0xff]
    %v966 = vld [vmem:[#allocation10 + $0x270] sm:$0xff]
    %v967 = vld [vmem:[#allocation10 + $0x278] sm:$0xff]
    %v968 = vld [vmem:[#allocation10 + $0x280] sm:$0xff]
    %v969 = vld [vmem:[#allocation10 + $0x288] sm:$0xff]
    %v970 = vld [vmem:[#allocation10 + $0x290] sm:$0xff]
    %v971 = vld [vmem:[#allocation10 + $0x298] sm:$0xff]
    %v972 = vld [vmem:[#allocation10 + $0x2a0] sm:$0xff]
    %v973 = vld [vmem:[#allocation10 + $0x2a8] sm:$0xff]
    %v974 = vld [vmem:[#allocation10 + $0x2b0] sm:$0xff]
    %v975 = vld [vmem:[#allocation10 + $0x2b8] sm:$0xff]
    %v976 = vld [vmem:[#allocation10 + $0x2c0] sm:$0xff]
    %v977 = vld [vmem:[#allocation10 + $0x2c8] sm:$0xff]
    %v978 = vld [vmem:[#allocation10 + $0x2d0] sm:$0xff]
    %v979 = vld [vmem:[#allocation10 + $0x2d8] sm:$0xff]
    %v980 = vld [vmem:[#allocation10 + $0x2e0] sm:$0xff]
    %v981 = vld [vmem:[#allocation10 + $0x2e8] sm:$0xff]
    %v982 = vld [vmem:[#allocation10 + $0x2f0] sm:$0xff]
    %v983 = vld [vmem:[#allocation10 + $0x2f8] sm:$0xff]
    %v984 = vld [vmem:[#allocation10 + $0x300] sm:$0xff]
    %v985 = vld [vmem:[#allocation10 + $0x308] sm:$0xff]
    %v986 = vld [vmem:[#allocation10 + $0x310] sm:$0xff]
    %v987 = vld [vmem:[#allocation10 + $0x318] sm:$0xff]
    %v988 = vld [vmem:[#allocation10 + $0x320] sm:$0xff]
    %v989 = vld [vmem:[#allocation10 + $0x328] sm:$0xff]
    %v990 = vld [vmem:[#allocation10 + $0x330] sm:$0xff]
    %v991 = vld [vmem:[#allocation10 + $0x338] sm:$0xff]
    %v992 = vld [vmem:[#allocation10 + $0x340] sm:$0xff]
    %v993 = vld [vmem:[#allocation10 + $0x348] sm:$0xff]
    %v994 = vld [vmem:[#allocation10 + $0x350] sm:$0xff]
    %v995 = vld [vmem:[#allocation10 + $0x358] sm:$0xff]
    %v996 = vld [vmem:[#allocation10 + $0x360] sm:$0xff]
    %v997 = vld [vmem:[#allocation10 + $0x368] sm:$0xff]
    %v998 = vld [vmem:[#allocation10 + $0x370] sm:$0xff]
    %v999 = vld [vmem:[#allocation10 + $0x378] sm:$0xff]
    %v1000 = vld [vmem:[#allocation10 + $0x380] sm:$0xff]
    %v1001 = vld [vmem:[#allocation10 + $0x388] sm:$0xff]
    %v1002 = vld [vmem:[#allocation10 + $0x390] sm:$0xff]
    %v1003 = vld [vmem:[#allocation10 + $0x398] sm:$0xff]
    %v1004 = vld [vmem:[#allocation10 + $0x3a0] sm:$0xff]
    %v1005 = vld [vmem:[#allocation10 + $0x3a8] sm:$0xff]
    %v1006 = vld [vmem:[#allocation10 + $0x3b0] sm:$0xff]
    %v1007 = vld [vmem:[#allocation10 + $0x3b8] sm:$0xff]
    %v1008 = vld [vmem:[#allocation10 + $0x3c0] sm:$0xff]
    %v1009 = vld [vmem:[#allocation10 + $0x3c8] sm:$0xff]
    %v1010 = vld [vmem:[#allocation10 + $0x3d0] sm:$0xff]
    %v1011 = vld [vmem:[#allocation10 + $0x3d8] sm:$0xff]
    %v1012 = vld [vmem:[#allocation10 + $0x3e0] sm:$0xff]
    %v1013 = vld [vmem:[#allocation10 + $0x3e8] sm:$0xff]
    %v1014 = vld [vmem:[#allocation10 + $0x3f0] sm:$0xff]
    %v1015 = vld [vmem:[#allocation10 + $0x3f8] sm:$0xff]
    %v1016 = vld [vmem:[%s8] sm:$0x3]
    %v1018 = vlaneseq
    %v1019 = vshrl.u32 %v1018, 7
    %v1020 = vsub.s32 0, %v1019
    %v1021 = vrot.slane %v1016, %v1020
    %v1022 = vlaneseq
    %v1023 = vshrl.u32 %v1022, 7
    %v1024 = vsub.s32 1, %v1023
    %v1025 = vrot.slane %v1016, %v1024
    %1028 = vmatprep.subr.mxu0 %v889
    %1029 = vmatpush1.msra.mxu0 %v888
    %1030 = vmatprep.subr.mxu0 %v891
    %1031 = vmatpush1.msra.mxu0 %v890
    %1032 = vmatprep.subr.mxu0 %v893
    %1033 = vmatpush1.msra.mxu0 %v892
    %1034 = vmatprep.subr.mxu0 %v895
    %1035 = vmatpush1.msra.mxu0 %v894
    %1036 = vmatprep.subr.mxu0 %v897
    %1037 = vmatpush1.msra.mxu0 %v896
    %1038 = vmatprep.subr.mxu0 %v899
    %1039 = vmatpush1.msra.mxu0 %v898
    %1040 = vmatprep.subr.mxu0 %v901
    %1041 = vmatpush1.msra.mxu0 %v900
    %1042 = vmatprep.subr.mxu0 %v903
    %1043 = vmatpush1.msra.mxu0 %v902
    %1044 = vmatprep.subr.mxu0 %v905
    %1045 = vmatpush1.msra.mxu0 %v904
    %1046 = vmatprep.subr.mxu0 %v907
    %1047 = vmatpush1.msra.mxu0 %v906
    %1048 = vmatprep.subr.mxu0 %v909
    %1049 = vmatpush1.msra.mxu0 %v908
    %1050 = vmatprep.subr.mxu0 %v911
    %1051 = vmatpush1.msra.mxu0 %v910
    %1052 = vmatprep.subr.mxu0 %v913
    %1053 = vmatpush1.msra.mxu0 %v912
    %1054 = vmatprep.subr.mxu0 %v915
    %1055 = vmatpush1.msra.mxu0 %v914
    %1056 = vmatprep.subr.mxu0 %v917
    %1057 = vmatpush1.msra.mxu0 %v916
    %1058 = vmatprep.subr.mxu0 %v919
    %1059 = vmatpush1.msra.mxu0 %v918
    %1060 = vmatprep.subr.mxu0 %v921
    %1061 = vmatpush1.msra.mxu0 %v920
    %1062 = vmatprep.subr.mxu0 %v923
    %1063 = vmatpush1.msra.mxu0 %v922
    %1064 = vmatprep.subr.mxu0 %v925
    %1065 = vmatpush1.msra.mxu0 %v924
    %1066 = vmatprep.subr.mxu0 %v927
    %1067 = vmatpush1.msra.mxu0 %v926
    %1068 = vmatprep.subr.mxu0 %v929
    %1069 = vmatpush1.msra.mxu0 %v928
    %1070 = vmatprep.subr.mxu0 %v931
    %1071 = vmatpush1.msra.mxu0 %v930
    %1072 = vmatprep.subr.mxu0 %v933
    %1073 = vmatpush1.msra.mxu0 %v932
    %1074 = vmatprep.subr.mxu0 %v935
    %1075 = vmatpush1.msra.mxu0 %v934
    %1076 = vmatprep.subr.mxu0 %v937
    %1077 = vmatpush1.msra.mxu0 %v936
    %1078 = vmatprep.subr.mxu0 %v939
    %1079 = vmatpush1.msra.mxu0 %v938
    %1080 = vmatprep.subr.mxu0 %v941
    %1081 = vmatpush1.msra.mxu0 %v940
    %1082 = vmatprep.subr.mxu0 %v943
    %1083 = vmatpush1.msra.mxu0 %v942
    %1084 = vmatprep.subr.mxu0 %v945
    %1085 = vmatpush1.msra.mxu0 %v944
    %1086 = vmatprep.subr.mxu0 %v947
    %1087 = vmatpush1.msra.mxu0 %v946
    %1088 = vmatprep.subr.mxu0 %v949
    %1089 = vmatpush1.msra.mxu0 %v948
    %1090 = vmatprep.subr.mxu0 %v951
    %1091 = vmatpush1.msra.mxu0 %v950
    %1092 = vmatprep.mubr.f32.mxu0 %v881
    %1093 = vmatmul.mubr.f32.gmra.mrb[0].mxu0 %v880
    %v1094 = vpop.f32.mrb[0].mxu0
    %v1095 = vadd.f32 %v1021, %v1094
    %v1096 = vpop.f32.mrb[0].mxu0
    %v1097 = vadd.f32 %v1025, %v1096
    %1098 = vmatprep.mubr.f32.mxu0 %v885
    %1099 = vmatmul.mubr.f32.gmra.mrb[0].mxu0 %v884
    %v1100 = vpop.f32.mrb[0].mxu0
    %v1101 = vadd.f32 %v1021, %v1100
    %v1102 = vpop.f32.mrb[0].mxu0
    %v1103 = vadd.f32 %v1025, %v1102
    %1104 = vdwg.mxu0
    %1105 = vmatprep.subr.mxu0 %v953
    %1106 = vmatpush1.msra.mxu0 %v952
    %1107 = vmatprep.subr.mxu0 %v955
    %1108 = vmatpush1.msra.mxu0 %v954
    %1109 = vmatprep.subr.mxu0 %v957
    %1110 = vmatpush1.msra.mxu0 %v956
    %1111 = vmatprep.subr.mxu0 %v959
    %1112 = vmatpush1.msra.mxu0 %v958
    %1113 = vmatprep.subr.mxu0 %v961
    %1114 = vmatpush1.msra.mxu0 %v960
    %1115 = vmatprep.subr.mxu0 %v963
    %1116 = vmatpush1.msra.mxu0 %v962
    %1117 = vmatprep.subr.mxu0 %v965
    %1118 = vmatpush1.msra.mxu0 %v964
    %1119 = vmatprep.subr.mxu0 %v967
    %1120 = vmatpush1.msra.mxu0 %v966
    %1121 = vmatprep.subr.mxu0 %v969
    %1122 = vmatpush1.msra.mxu0 %v968
    %1123 = vmatprep.subr.mxu0 %v971
    %1124 = vmatpush1.msra.mxu0 %v970
    %1125 = vmatprep.subr.mxu0 %v973
    %1126 = vmatpush1.msra.mxu0 %v972
    %1127 = vmatprep.subr.mxu0 %v975
    %1128 = vmatpush1.msra.mxu0 %v974
    %1129 = vmatprep.subr.mxu0 %v977
    %1130 = vmatpush1.msra.mxu0 %v976
    %1131 = vmatprep.subr.mxu0 %v979
    %1132 = vmatpush1.msra.mxu0 %v978
    %1133 = vmatprep.subr.mxu0 %v981
    %1134 = vmatpush1.msra.mxu0 %v980
    %1135 = vmatprep.subr.mxu0 %v983
    %1136 = vmatpush1.msra.mxu0 %v982
    %1137 = vmatprep.subr.mxu0 %v985
    %1138 = vmatpush1.msra.mxu0 %v984
    %1139 = vmatprep.subr.mxu0 %v987
    %1140 = vmatpush1.msra.mxu0 %v986
    %1141 = vmatprep.subr.mxu0 %v989
    %1142 = vmatpush1.msra.mxu0 %v988
    %1143 = vmatprep.subr.mxu0 %v991
    %1144 = vmatpush1.msra.mxu0 %v990
    %1145 = vmatprep.subr.mxu0 %v993
    %1146 = vmatpush1.msra.mxu0 %v992
    %1147 = vmatprep.subr.mxu0 %v995
    %1148 = vmatpush1.msra.mxu0 %v994
    %1149 = vmatprep.subr.mxu0 %v997
    %1150 = vmatpush1.msra.mxu0 %v996
    %1151 = vmatprep.subr.mxu0 %v999
    %1152 = vmatpush1.msra.mxu0 %v998
    %1153 = vmatprep.subr.mxu0 %v1001
    %1154 = vmatpush1.msra.mxu0 %v1000
    %1155 = vmatprep.subr.mxu0 %v1003
    %1156 = vmatpush1.msra.mxu0 %v1002
    %1157 = vmatprep.subr.mxu0 %v1005
    %1158 = vmatpush1.msra.mxu0 %v1004
    %1159 = vmatprep.subr.mxu0 %v1007
    %1160 = vmatpush1.msra.mxu0 %v1006
    %1161 = vmatprep.subr.mxu0 %v1009
    %1162 = vmatpush1.msra.mxu0 %v1008
    %1163 = vmatprep.subr.mxu0 %v1011
    %1164 = vmatpush1.msra.mxu0 %v1010
    %1165 = vmatprep.subr.mxu0 %v1013
    %1166 = vmatpush1.msra.mxu0 %v1012
    %1167 = vmatprep.subr.mxu0 %v1015
    %1168 = vmatpush1.msra.mxu0 %v1014
    %1169 = vmatprep.mubr.f32.mxu0 %v883
    %1170 = vmatmul.mubr.f32.gmra.mrb[0].mxu0 %v882
    %v1171 = vpop.f32.mrb[0].mxu0
    %v1172 = vadd.f32 %v1095, %v1171
    %v1173 = vpop.f32.mrb[0].mxu0
    %v1174 = vadd.f32 %v1097, %v1173
    %1175 = vmatprep.mubr.f32.mxu0 %v887
    %1176 = vmatmul.mubr.f32.gmra.mrb[0].mxu0 %v886
    %v1177 = vpop.f32.mrb[0].mxu0
    %v1178 = vadd.f32 %v1101, %v1177
    %v1179 = vpop.f32.mrb[0].mxu0
    %v1180 = vadd.f32 %v1103, %v1179
    %1181 = vdwg.mxu0
    %v1182 = vxor.u32 %v1172, 2147483648
    %v1183 = vxor.u32 %v1174, 2147483648
    %v1184 = vxor.u32 %v1178, 2147483648
    %v1185 = vxor.u32 %v1180, 2147483648
    %v1186 = vmul.f32 %v1182, 1.442695
    %v1187 = vpow.pop %v1186
    %v1188 = vmul.f32 %v1183, 1.442695
    %v1189 = vpow.pop %v1188
    %v1190 = vmul.f32 %v1184, 1.442695
    %v1191 = vpow.pop %v1190
    %v1192 = vmul.f32 %v1185, 1.442695
    %v1193 = vpow.pop %v1192
    %v1194 = vadd.f32 %v1187, 1.0
    %v1195 = vadd.f32 %v1189, 1.0
    %v1196 = vadd.f32 %v1191, 1.0
    %v1197 = vadd.f32 %v1193, 1.0
    %v1198 = vrcp.pop %v1194
    %v1199 = vmul.f32 1.0, %v1198
    %v1200 = vrcp.pop %v1195
    %v1201 = vmul.f32 1.0, %v1200
    %v1202 = vrcp.pop %v1196
    %v1203 = vmul.f32 1.0, %v1202
    %v1204 = vrcp.pop %v1197
    %v1205 = vmul.f32 1.0, %v1204
    %1206 = vst [vmem:[#allocation11] sm:$0xff] %v1199
    %1207 = vst [vmem:[#allocation11 + $0x8] sm:$0xff] %v1201
    %1208 = vst [vmem:[#allocation11 + $0x10] sm:$0xff] %v1203
    %1209 = vst [vmem:[#allocation11 + $0x18] sm:$0xff] %v1205
    // Predicated region
    $region58: #{tpu_custom_call.1} parent=1 // pred_check
      _
    $region59: #{tpu_custom_call.1} parent=1 // pred_check_branch
      %1211 = sbr.rel (0) target = $region61
    $region60: #{tpu_custom_call.1} parent=1 // pred_region
      %s1213 = ssub.s32 512, 512
      %1214 = vsyncadd [#allocation4], %s1213
      %s1215 = sshll.u32 [#allocation11], 4
      %s1216 = int_to_ptr.vmem [resolvable:$true] %s1215
      %1221 = dma.vmem_to_hbm [thread:$0]  %s1216, 512, %s9, [#allocation4], 256, 256, 16
    $region61: #{tpu_custom_call.1} parent=1 // pred_fallthru
      _
    // Predicated region
    $region62: #{tpu_custom_call.1} parent=1 // pred_check
      _
    $region63: #{tpu_custom_call.1} parent=1 // pred_check_branch
      %1223 = sbr.rel (0) target = $region65
    $region64: #{tpu_custom_call.1} parent=1 // pred_region
      %1224 = dma.done [#allocation4], 512
    $region65: #{tpu_custom_call.1} parent=1 // pred_fallthru
      _
    %1225 = vsyncpa [#allocation3], 1
    %1226 = vsyncpa [#allocation6], 1
    %1227 = vsyncpa [#allocation9], 1
    %1228 = vsyncpa [#allocation4], 1

</llo_original>
